<compile_context>
chip_gen: v5e
topology: v5e:2x2
jax: 0.10.0
libtpu: 0.0.40
codegen_flags: <defaults>
</compile_context>

<pallas_src>
import functools
import math

import jax
import jax.numpy as jnp
from jax.experimental import pallas as pl
from jax.experimental.pallas import tpu as pltpu


# Scoped-VMEM cap: above the 16/32 MiB defaults, below v7x's 64 MiB physical.
_VMEM_LIMIT_BYTES = 48 * 1024 * 1024


# ----------------------------------------------------------------------------
# tiling helpers
# ----------------------------------------------------------------------------
def _pick_row_tile(m, target=512):
    """Row (sublane) tile: multiple of 8.  Returns (tile, padded_m)."""
    if m <= target:
        pad = (-m) % 8
        return m + pad, m + pad
    t = (target // 8) * 8
    while t >= 128:
        if m % t == 0:
            return t, m
        t -= 8
    # no reasonable divisor: pad M up to a multiple of the target tile
    mp = ((m + target - 1) // target) * target
    return target, mp


def _pick_col_tile(n, target=512):
    """Lane tile: must be a multiple of 128 (or the full dimension)."""
    if n <= target:
        return n
    t = (target // 128) * 128
    while t >= 128:
        if n % t == 0:
            return t
        t -= 128
    return n


def _pick_seq_tile(t_len, target):
    if t_len <= target:
        return t_len
    t = (target // 8) * 8
    while t >= 8:
        if t_len % t == 0:
            return t
        t -= 8
    return t_len


def _pad_rows(a, mp):
    m = a.shape[0]
    if mp == m:
        return a
    return jnp.pad(a, ((0, mp - m), (0, 0)))


# ----------------------------------------------------------------------------
# Kernel 1: fused LayerNorm + Conv1D (+ optional tanh-gelu), N-tiled weights
#   out = act( LN(x) @ W + b )
# ----------------------------------------------------------------------------
def _ln_linear_kernel(x_ref, g_ref, gb_ref, w_ref, wb_ref, o_ref, xn_ref, *, eps, act):
    # grid = (row tiles i [parallel], col tiles j [arbitrary]); j is innermost.
    @pl.when(pl.program_id(1) == 0)
    def _():
        x = x_ref[...].astype(jnp.float32)
        u = jnp.mean(x, axis=-1, keepdims=True)
        xc = x - u
        s = jnp.mean(xc * xc, axis=-1, keepdims=True)
        xn = xc * jax.lax.rsqrt(s + jnp.float32(eps))
        xn = xn * g_ref[...].astype(jnp.float32) + gb_ref[...].astype(jnp.float32)
        # cached (and cast to the matmul dtype) once per row tile
        xn_ref[...] = xn.astype(xn_ref.dtype)

    h = jnp.dot(xn_ref[...], w_ref[...], preferred_element_type=jnp.float32)
    h = h + wb_ref[...].astype(jnp.float32)
    if act == "gelu":
        c = jnp.float32(math.sqrt(2.0 / math.pi))
        h = 0.5 * h * (1.0 + jnp.tanh(c * (h + 0.044715 * h * h * h)))
    o_ref[...] = h.astype(o_ref.dtype)


def ln_linear(x2d, gamma, beta, w, b, *, eps=1e-5, act=None,
              matmul_dtype=jnp.bfloat16, row_tile=512, col_tile=512):
    m, k = x2d.shape
    n = w.shape[1]
    tm, mp = _pick_row_tile(m, row_tile)
    tn = _pick_col_tile(n, col_tile)
    xp = _pad_rows(x2d, mp)
    w = w.astype(matmul_dtype)

    itemsize = jnp.dtype(matmul_dtype).itemsize
    flops = 2 * mp * k * n + 10 * mp * k
    trans = mp * n if act == "gelu" else 0
    bytes_acc = 4 * (mp * k + mp * n + 2 * k + n) + itemsize * k * n * (mp // tm)

    out = pl.pallas_call(
        functools.partial(_ln_linear_kernel, eps=eps, act=act),
        out_shape=jax.ShapeDtypeStruct((mp, n), x2d.dtype),
        grid=(mp // tm, n // tn),
        in_specs=[
            pl.BlockSpec((tm, k), lambda i, j: (i, 0)),     # x rows
            pl.BlockSpec((1, k), lambda i, j: (0, 0)),      # gamma
            pl.BlockSpec((1, k), lambda i, j: (0, 0)),      # beta
            pl.BlockSpec((k, tn), lambda i, j: (0, j)),     # weight column tile
            pl.BlockSpec((1, tn), lambda i, j: (0, j)),     # bias column tile
        ],
        out_specs=pl.BlockSpec((tm, tn), lambda i, j: (i, j)),
        scratch_shapes=[pltpu.VMEM((tm, k), matmul_dtype)],
        compiler_params=pltpu.CompilerParams(
            dimension_semantics=("parallel", "arbitrary"),
            vmem_limit_bytes=_VMEM_LIMIT_BYTES),
        cost_estimate=pl.CostEstimate(flops=int(flops), transcendentals=int(trans),
                                      bytes_accessed=int(bytes_acc)),
    )(xp, gamma.reshape(1, k), beta.reshape(1, k), w, b.reshape(1, n))
    return out if mp == m else out[:m]


# ----------------------------------------------------------------------------
# Kernel 2: fused Conv1D + residual add, N-tiled weights
#   out = x @ W + b + residual
# ----------------------------------------------------------------------------
def _linear_res_kernel(x_ref, w_ref, b_ref, r_ref, o_ref):
    x = x_ref[...].astype(w_ref.dtype)                 # bf16 MXU matmul, f32 accum
    acc = jnp.dot(x, w_ref[...], preferred_element_type=jnp.float32)
    acc = acc + b_ref[...].astype(jnp.float32) + r_ref[...].astype(jnp.float32)
    o_ref[...] = acc.astype(o_ref.dtype)


def linear_residual(x2d, w, b, res2d, *, matmul_dtype=jnp.bfloat16,
                    row_tile=512, col_tile=512):
    m, k = x2d.shape
    n = w.shape[1]
    tm, mp = _pick_row_tile(m, row_tile)
    tn = _pick_col_tile(n, col_tile)
    xp = _pad_rows(x2d, mp)
    rp = _pad_rows(res2d, mp)
    w = w.astype(matmul_dtype)

    itemsize = jnp.dtype(matmul_dtype).itemsize
    flops = 2 * mp * k * n + 2 * mp * n
    bytes_acc = 4 * (mp * k + 2 * mp * n + n) + itemsize * k * n * (mp // tm)

    out = pl.pallas_call(
        _linear_res_kernel,
        out_shape=jax.ShapeDtypeStruct((mp, n), x2d.dtype),
        grid=(mp // tm, n // tn),
        in_specs=[
            pl.BlockSpec((tm, k), lambda i, j: (i, 0)),
            pl.BlockSpec((k, tn), lambda i, j: (0, j)),
            pl.BlockSpec((1, tn), lambda i, j: (0, j)),
            pl.BlockSpec((tm, tn), lambda i, j: (i, j)),
        ],
        out_specs=pl.BlockSpec((tm, tn), lambda i, j: (i, j)),
        compiler_params=pltpu.CompilerParams(
            dimension_semantics=("parallel", "parallel"),
            vmem_limit_bytes=_VMEM_LIMIT_BYTES),
        cost_estimate=pl.CostEstimate(flops=int(flops), transcendentals=0,
                                      bytes_accessed=int(bytes_acc)),
    )(xp, w, b.reshape(1, n), rp)
    return out if mp == m else out[:m]


# ----------------------------------------------------------------------------
# Kernel 3: causal MHA (flash-style over KV tiles, head-batched) fused with
# the attention c_proj and the residual add:
#   out = residual + c_proj( MHA(qkv) )
# ----------------------------------------------------------------------------
def _attn_proj_res_kernel(q_ref, kv_ref, pw_ref, pb_ref, r_ref, o_ref, *,
                          n_head, nx, dh, t_kv, scale, matmul_dtype):
    tq = q_ref.shape[1]
    t_total = kv_ref.shape[1]
    num_kv = t_total // t_kv
    row_base = pl.program_id(1) * tq

    # q for this row tile, head-batched: (H, tq, dh)
    q3 = jnp.stack(
        [q_ref[0, :, h * dh:(h + 1) * dh] for h in range(n_head)], axis=0
    ).astype(matmul_dtype)

    neg = jnp.float32(-10000.0)                  # same mask fill as the reference
    inv_sqrt_dh = jnp.float32(1.0 / math.sqrt(dh))

    def kv_step(j, carry):
        m_i, l_i, acc = carry
        if isinstance(j, int):
            start = j * t_kv
        else:
            start = pl.multiple_of(j * t_kv, t_kv)
        col_base = j * t_kv

        k3 = jnp.stack(
            [kv_ref[0, pl.ds(start, t_kv), nx + h * dh: nx + (h + 1) * dh]
             for h in range(n_head)], axis=0).astype(matmul_dtype)
        v3 = jnp.stack(
            [kv_ref[0, pl.ds(start, t_kv), 2 * nx + h * dh: 2 * nx + (h + 1) * dh]
             for h in range(n_head)], axis=0).astype(matmul_dtype)

        s = jnp.einsum("hqd,hkd->hqk", q3, k3,
                       preferred_element_type=jnp.float32)     # (H, tq, t_kv)
        if scale:
            s = s * inv_sqrt_dh
        rows = row_base + jax.lax.broadcasted_iota(jnp.int32, (tq, t_kv), 0)
        cols = col_base + jax.lax.broadcasted_iota(jnp.int32, (tq, t_kv), 1)
        s = jnp.where((cols <= rows)[None], s, neg)             # causal (tril)

        m_new = jnp.maximum(m_i, jnp.max(s, axis=-1, keepdims=True))
        alpha = jnp.exp(m_i - m_new)
        p = jnp.exp(s - m_new)
        l_new = alpha * l_i + jnp.sum(p, axis=-1, keepdims=True)
        pv = jnp.einsum("hqk,hkd->hqd", p.astype(matmul_dtype), v3,
                        preferred_element_type=jnp.float32)
        return m_new, l_new, alpha * acc + pv

    init = (jnp.full((n_head, tq, 1), -jnp.inf, jnp.float32),
            jnp.zeros((n_head, tq, 1), jnp.float32),
            jnp.zeros((n_head, tq, dh), jnp.float32))
    if num_kv == 1:
        _, l_i, acc = kv_step(0, init)
    else:
        # causal: only KV tiles whose start is below the end of this q tile matter
        kv_needed = jnp.minimum(num_kv, (row_base + tq + t_kv - 1) // t_kv)
        _, l_i, acc = jax.lax.fori_loop(0, kv_needed, kv_step, init)

    out = acc / l_i                                             # exact softmax denom
    merged = jnp.concatenate([out[h] for h in range(n_head)], axis=-1)  # (tq, nx)

    # fused attn c_proj + residual -> single lane-dense (tq, nx) store
    y = jnp.dot(merged.astype(pw_ref.dtype), pw_ref[...],
                preferred_element_type=jnp.float32)
    y = y + pb_ref[...].astype(jnp.float32) + r_ref[0].astype(jnp.float32)
    o_ref[0] = y.astype(o_ref.dtype)


def attention_proj_residual(qkv, x, proj_w, proj_b, *, n_head, scale=False,
                            matmul_dtype=jnp.bfloat16, q_tile=256, kv_tile=512):
    """qkv: (B, T, 3*nx), x: (B, T, nx) residual -> (B, T, nx)."""
    b_sz, t_len, nx3 = qkv.shape
    nx = nx3 // 3
    dh = nx // n_head
    tq = _pick_seq_tile(t_len, q_tile)
    tkv = _pick_seq_tile(t_len, kv_tile)
    qt = t_len // tq
    proj_w = proj_w.astype(matmul_dtype)

    flops = (b_sz * n_head * (4 * t_len * t_len * dh + 6 * t_len * t_len)
             + 2 * b_sz * t_len * nx * nx)
    trans = b_sz * n_head * t_len * t_len
    bytes_acc = (4 * (2 * b_sz * t_len * nx3 + 2 * b_sz * t_len * nx)
                 + jnp.dtype(matmul_dtype).itemsize * nx * nx)

    kernel = functools.partial(
        _attn_proj_res_kernel, n_head=n_head, nx=nx, dh=dh, t_kv=tkv,
        scale=scale, matmul_dtype=matmul_dtype)

    return pl.pallas_call(
        kernel,
        out_shape=jax.ShapeDtypeStruct((b_sz, t_len, nx), x.dtype),
        grid=(b_sz, qt),
        in_specs=[
            pl.BlockSpec((1, tq, nx3), lambda b, qi: (b, qi, 0)),    # q rows
            pl.BlockSpec((1, t_len, nx3), lambda b, qi: (b, 0, 0)),  # K/V rows, resident per batch
            pl.BlockSpec((nx, nx), lambda b, qi: (0, 0)),            # c_proj weight
            pl.BlockSpec((1, nx), lambda b, qi: (0, 0)),             # c_proj bias
            pl.BlockSpec((1, tq, nx), lambda b, qi: (b, qi, 0)),     # residual (x)
        ],
        out_specs=pl.BlockSpec((1, tq, nx), lambda b, qi: (b, qi, 0)),
        compiler_params=pltpu.CompilerParams(
            dimension_semantics=("parallel", "parallel"),
            vmem_limit_bytes=_VMEM_LIMIT_BYTES),
        cost_estimate=pl.CostEstimate(flops=int(flops), transcendentals=int(trans),
                                      bytes_accessed=int(bytes_acc)),
    )(qkv, qkv, proj_w, proj_b.reshape(1, nx), x)


# ----------------------------------------------------------------------------
# Block.forward (layer_past=None path)
# ----------------------------------------------------------------------------
def block_forward(x, params, *, n_head, scale=False, eps=1e-5,
                  matmul_dtype=jnp.bfloat16):
    b_sz, t_len, nx = x.shape
    dh = nx // n_head
    x2d = x.reshape(b_sz * t_len, nx)

    # ln_1 + c_attn -> packed QKV (B, T, 3*nx)
    qkv = ln_linear(x2d, params["ln1_g"], params["ln1_b"],
                    params["attn_w"], params["attn_b"], eps=eps,
                    matmul_dtype=matmul_dtype)
    qkv = qkv.reshape(b_sz, t_len, 3 * nx)

    # present = stack(key, value), head-split (2, B, H, T, dh): derived from
    # the packed QKV outside the kernel (one XLA reshape/transpose, no masked
    # dh-wide stores in-kernel, no extra jnp.stack round trip).
    present = (qkv[:, :, nx:]
               .reshape(b_sz, t_len, 2, n_head, dh)
               .transpose(2, 0, 3, 1, 4))

    # causal MHA + c_proj + residual:  x1 = x + c_proj(attn(qkv))
    x1 = attention_proj_residual(qkv, x, params["proj_w"], params["proj_b"],
                                 n_head=n_head, scale=scale,
                                 matmul_dtype=matmul_dtype)
    x1_2d = x1.reshape(b_sz * t_len, nx)

    # ln_2 + c_fc + gelu
    h = ln_linear(x1_2d, params["ln2_g"], params["ln2_b"],
                  params["fc_w"], params["fc_b"], eps=eps, act="gelu",
                  matmul_dtype=matmul_dtype)

    # mlp c_proj + residual:  x2 = x1 + c_proj(gelu(...))
    x2 = linear_residual(h, params["mlp_proj_w"], params["mlp_proj_b"], x1_2d,
                         matmul_dtype=matmul_dtype)

    return x2.reshape(b_sz, t_len, nx), present


if __name__ == "__main__":
    # config: n_embd = 32, n_ctx = seq = 8, n_head = 4, scale = False
    B, T, NX, H = 2, 8, 32, 4
    EPS = 1e-5

    key = jax.random.PRNGKey(0)
    kx, k1, k2, k3, k4 = jax.random.split(key, 5)

    x = jax.random.normal(kx, (B, T, NX), dtype=jnp.float32)
    params = dict(
        ln1_g=jnp.ones((NX,), jnp.float32),
        ln1_b=jnp.zeros((NX,), jnp.float32),
        attn_w=0.02 * jax.random.normal(k1, (NX, 3 * NX), dtype=jnp.float32),
        attn_b=jnp.zeros((3 * NX,), jnp.float32),
        proj_w=0.02 * jax.random.normal(k2, (NX, NX), dtype=jnp.float32),
        proj_b=jnp.zeros((NX,), jnp.float32),
        ln2_g=jnp.ones((NX,), jnp.float32),
        ln2_b=jnp.zeros((NX,), jnp.float32),
        fc_w=0.02 * jax.random.normal(k3, (NX, 4 * NX), dtype=jnp.float32),
        fc_b=jnp.zeros((4 * NX,), jnp.float32),
        mlp_proj_w=0.02 * jax.random.normal(k4, (4 * NX, NX), dtype=jnp.float32),
        mlp_proj_b=jnp.zeros((NX,), jnp.float32),
    )

    fwd = jax.jit(functools.partial(block_forward, n_head=H, scale=False, eps=EPS))
    y, present = fwd(x, params)
    jax.block_until_ready((y, present))
    assert y.shape == (B, T, NX)
    assert present.shape == (2, B, H, T, NX // H)
    assert bool(jnp.all(jnp.isfinite(y)))
    print("KERNEL_OK")
</pallas_src>

<mosaic_0001>
module attributes {stable_mosaic.version = 11 : i64} {
  func.func @_ln_linear_kernel(%arg0: i32, %arg1: i32, %arg2: memref<16x32xf32, #tpu.memory_space<vmem>>, %arg3: memref<1x32xf32, #tpu.memory_space<vmem>>, %arg4: memref<1x32xf32, #tpu.memory_space<vmem>>, %arg5: memref<32x96xbf16, #tpu.memory_space<vmem>>, %arg6: memref<1x96xf32, #tpu.memory_space<vmem>>, %arg7: memref<16x96xf32, #tpu.memory_space<vmem>>, %arg8: memref<16x32xbf16, #tpu.memory_space<vmem>>) attributes {dimension_semantics = [#tpu.dimension_semantics<parallel>, #tpu.dimension_semantics<arbitrary>], iteration_bounds = array<i64: 1, 1>, scalar_prefetch = 0 : i64, scratch_operands = 1 : i64, tpu.core_type = #tpu.core_type<tc>, window_params = [{transform_indices = @transform_0, window_bounds = array<i64: 16, 32>}, {pipeline_mode = #tpu.pipeline_mode<synchronous>, transform_indices = @transform_1, window_bounds = array<i64: 1, 32>}, {pipeline_mode = #tpu.pipeline_mode<synchronous>, transform_indices = @transform_2, window_bounds = array<i64: 1, 32>}, {transform_indices = @transform_3, window_bounds = array<i64: 32, 96>}, {transform_indices = @transform_4, window_bounds = array<i64: 1, 96>}, {transform_indices = @transform_5, window_bounds = array<i64: 16, 96>}]} {
    %c0_i32 = arith.constant 0 : i32
    %0 = arith.cmpi eq, %arg1, %c0_i32 : i32
    %1 = arith.extui %0 : i1 to i32
    %c0_i32_0 = arith.constant 0 : i32
    %2 = arith.cmpi ne, %1, %c0_i32_0 : i32
    scf.if %2 {
      %c0_8 = arith.constant 0 : index
      %c0_9 = arith.constant 0 : index
      %10 = vector.load %arg2[%c0_8, %c0_9] : memref<16x32xf32, #tpu.memory_space<vmem>>, vector<16x32xf32>
      %cst_10 = arith.constant dense<0.000000e+00> : vector<16xf32>
      %11 = vector.multi_reduction <add>, %10, %cst_10 [1] : vector<16x32xf32> to vector<16xf32>
      %12 = vector.shape_cast %11 : vector<16xf32> to vector<16x1xf32>
      %cst_11 = arith.constant 3.200000e+01 : f32
      %13 = vector.broadcast %cst_11 : f32 to vector<16x1xf32>
      %14 = arith.divf %12, %13 : vector<16x1xf32>
      %15 = vector.broadcast %14 : vector<16x1xf32> to vector<16x32xf32>
      %16 = arith.subf %10, %15 : vector<16x32xf32>
      %17 = arith.mulf %16, %16 : vector<16x32xf32>
      %cst_12 = arith.constant dense<0.000000e+00> : vector<16xf32>
      %18 = vector.multi_reduction <add>, %17, %cst_12 [1] : vector<16x32xf32> to vector<16xf32>
      %19 = vector.shape_cast %18 : vector<16xf32> to vector<16x1xf32>
      %cst_13 = arith.constant 3.200000e+01 : f32
      %20 = vector.broadcast %cst_13 : f32 to vector<16x1xf32>
      %21 = arith.divf %19, %20 : vector<16x1xf32>
      %cst_14 = arith.constant 9.99999974E-6 : f32
      %22 = vector.broadcast %cst_14 : f32 to vector<16x1xf32>
      %23 = arith.addf %21, %22 : vector<16x1xf32>
      %24 = math.rsqrt %23 : vector<16x1xf32>
      %25 = vector.broadcast %24 : vector<16x1xf32> to vector<16x32xf32>
      %26 = arith.mulf %16, %25 : vector<16x32xf32>
      %c0_15 = arith.constant 0 : index
      %c0_16 = arith.constant 0 : index
      %27 = vector.load %arg3[%c0_15, %c0_16] : memref<1x32xf32, #tpu.memory_space<vmem>>, vector<1x32xf32>
      %28 = vector.broadcast %27 : vector<1x32xf32> to vector<16x32xf32>
      %29 = arith.mulf %26, %28 : vector<16x32xf32>
      %c0_17 = arith.constant 0 : index
      %c0_18 = arith.constant 0 : index
      %30 = vector.load %arg4[%c0_17, %c0_18] : memref<1x32xf32, #tpu.memory_space<vmem>>, vector<1x32xf32>
      %31 = vector.broadcast %30 : vector<1x32xf32> to vector<16x32xf32>
      %32 = arith.addf %29, %31 : vector<16x32xf32>
      %33 = arith.truncf %32 : vector<16x32xf32> to vector<16x32xbf16>
      %c0_19 = arith.constant 0 : index
      %c0_20 = arith.constant 0 : index
      %34 = vector.load %arg8[%c0_19, %c0_20] : memref<16x32xbf16, #tpu.memory_space<vmem>>, vector<16x32xbf16>
      tpu.vector_store %arg8[%c0_19, %c0_20], %33 {strides = array<i32>} : memref<16x32xbf16, #tpu.memory_space<vmem>>, vector<16x32xbf16>,
    } else {
    }
    %c0 = arith.constant 0 : index
    %c0_1 = arith.constant 0 : index
    %3 = vector.load %arg8[%c0, %c0_1] : memref<16x32xbf16, #tpu.memory_space<vmem>>, vector<16x32xbf16>
    %c0_2 = arith.constant 0 : index
    %c0_3 = arith.constant 0 : index
    %4 = vector.load %arg5[%c0_2, %c0_3] : memref<32x96xbf16, #tpu.memory_space<vmem>>, vector<32x96xbf16>
    %cst = arith.constant dense<0.000000e+00> : vector<16x96xf32>
    %5 = tpu.matmul %3, %4, %cst {dimension_numbers = #tpu.dot_dimension_numbers<[1], [0], [0], [1], [0, 0, 1, 1], [], []>} : vector<16x32xbf16>, vector<32x96xbf16>, vector<16x96xf32> -> vector<16x96xf32>
    %c0_4 = arith.constant 0 : index
    %c0_5 = arith.constant 0 : index
    %6 = vector.load %arg6[%c0_4, %c0_5] : memref<1x96xf32, #tpu.memory_space<vmem>>, vector<1x96xf32>
    %7 = vector.broadcast %6 : vector<1x96xf32> to vector<16x96xf32>
    %8 = arith.addf %5, %7 : vector<16x96xf32>
    %c0_6 = arith.constant 0 : index
    %c0_7 = arith.constant 0 : index
    %9 = vector.load %arg7[%c0_6, %c0_7] : memref<16x96xf32, #tpu.memory_space<vmem>>, vector<16x96xf32>
    tpu.vector_store %arg7[%c0_6, %c0_7], %8 {strides = array<i32>} : memref<16x96xf32, #tpu.memory_space<vmem>>, vector<16x96xf32>,
    return
  }
  func.func @transform_0(%arg0: i32, %arg1: i32) -> (i32, i32) {
    %c0_i32 = arith.constant 0 : i32
    %c0_i32_0 = arith.constant 0 : i32
    return %arg0, %c0_i32 : i32, i32
  }
  func.func @transform_1(%arg0: i32, %arg1: i32) -> (i32, i32) {
    %c0_i32 = arith.constant 0 : i32
    %c0_i32_0 = arith.constant 0 : i32
    %c0_i32_1 = arith.constant 0 : i32
    return %c0_i32, %c0_i32_0 : i32, i32
  }
  func.func @transform_2(%arg0: i32, %arg1: i32) -> (i32, i32) {
    %c0_i32 = arith.constant 0 : i32
    %c0_i32_0 = arith.constant 0 : i32
    %c0_i32_1 = arith.constant 0 : i32
    return %c0_i32, %c0_i32_0 : i32, i32
  }
  func.func @transform_3(%arg0: i32, %arg1: i32) -> (i32, i32) {
    %c0_i32 = arith.constant 0 : i32
    %c0_i32_0 = arith.constant 0 : i32
    return %c0_i32, %arg1 : i32, i32
  }
  func.func @transform_4(%arg0: i32, %arg1: i32) -> (i32, i32) {
    %c0_i32 = arith.constant 0 : i32
    %c0_i32_0 = arith.constant 0 : i32
    return %c0_i32, %arg1 : i32, i32
  }
  func.func @transform_5(%arg0: i32, %arg1: i32) -> (i32, i32) {
    %c0_i32 = arith.constant 0 : i32
    return %arg0, %arg1 : i32, i32
  }
}

module attributes {stable_mosaic.version = 11 : i64} {
  func.func @_ln_linear_kernel(%arg0: i32, %arg1: i32, %arg2: memref<16x32xf32, #tpu.memory_space<vmem>>, %arg3: memref<1x32xf32, #tpu.memory_space<vmem>>, %arg4: memref<1x32xf32, #tpu.memory_space<vmem>>, %arg5: memref<32x128xbf16, #tpu.memory_space<vmem>>, %arg6: memref<1x128xf32, #tpu.memory_space<vmem>>, %arg7: memref<16x128xf32, #tpu.memory_space<vmem>>, %arg8: memref<16x32xbf16, #tpu.memory_space<vmem>>) attributes {dimension_semantics = [#tpu.dimension_semantics<parallel>, #tpu.dimension_semantics<arbitrary>], iteration_bounds = array<i64: 1, 1>, scalar_prefetch = 0 : i64, scratch_operands = 1 : i64, tpu.core_type = #tpu.core_type<tc>, window_params = [{transform_indices = @transform_0, window_bounds = array<i64: 16, 32>}, {pipeline_mode = #tpu.pipeline_mode<synchronous>, transform_indices = @transform_1, window_bounds = array<i64: 1, 32>}, {pipeline_mode = #tpu.pipeline_mode<synchronous>, transform_indices = @transform_2, window_bounds = array<i64: 1, 32>}, {transform_indices = @transform_3, window_bounds = array<i64: 32, 128>}, {transform_indices = @transform_4, window_bounds = array<i64: 1, 128>}, {transform_indices = @transform_5, window_bounds = array<i64: 16, 128>}]} {
    %c0_i32 = arith.constant 0 : i32
    %0 = arith.cmpi eq, %arg1, %c0_i32 : i32
    %1 = arith.extui %0 : i1 to i32
    %c0_i32_0 = arith.constant 0 : i32
    %2 = arith.cmpi ne, %1, %c0_i32_0 : i32
    scf.if %2 {
      %c0_12 = arith.constant 0 : index
      %c0_13 = arith.constant 0 : index
      %23 = vector.load %arg2[%c0_12, %c0_13] : memref<16x32xf32, #tpu.memory_space<vmem>>, vector<16x32xf32>
      %cst_14 = arith.constant dense<0.000000e+00> : vector<16xf32>
      %24 = vector.multi_reduction <add>, %23, %cst_14 [1] : vector<16x32xf32> to vector<16xf32>
      %25 = vector.shape_cast %24 : vector<16xf32> to vector<16x1xf32>
      %cst_15 = arith.constant 3.200000e+01 : f32
      %26 = vector.broadcast %cst_15 : f32 to vector<16x1xf32>
      %27 = arith.divf %25, %26 : vector<16x1xf32>
      %28 = vector.broadcast %27 : vector<16x1xf32> to vector<16x32xf32>
      %29 = arith.subf %23, %28 : vector<16x32xf32>
      %30 = arith.mulf %29, %29 : vector<16x32xf32>
      %cst_16 = arith.constant dense<0.000000e+00> : vector<16xf32>
      %31 = vector.multi_reduction <add>, %30, %cst_16 [1] : vector<16x32xf32> to vector<16xf32>
      %32 = vector.shape_cast %31 : vector<16xf32> to vector<16x1xf32>
      %cst_17 = arith.constant 3.200000e+01 : f32
      %33 = vector.broadcast %cst_17 : f32 to vector<16x1xf32>
      %34 = arith.divf %32, %33 : vector<16x1xf32>
      %cst_18 = arith.constant 9.99999974E-6 : f32
      %35 = vector.broadcast %cst_18 : f32 to vector<16x1xf32>
      %36 = arith.addf %34, %35 : vector<16x1xf32>
      %37 = math.rsqrt %36 : vector<16x1xf32>
      %38 = vector.broadcast %37 : vector<16x1xf32> to vector<16x32xf32>
      %39 = arith.mulf %29, %38 : vector<16x32xf32>
      %c0_19 = arith.constant 0 : index
      %c0_20 = arith.constant 0 : index
      %40 = vector.load %arg3[%c0_19, %c0_20] : memref<1x32xf32, #tpu.memory_space<vmem>>, vector<1x32xf32>
      %41 = vector.broadcast %40 : vector<1x32xf32> to vector<16x32xf32>
      %42 = arith.mulf %39, %41 : vector<16x32xf32>
      %c0_21 = arith.constant 0 : index
      %c0_22 = arith.constant 0 : index
      %43 = vector.load %arg4[%c0_21, %c0_22] : memref<1x32xf32, #tpu.memory_space<vmem>>, vector<1x32xf32>
      %44 = vector.broadcast %43 : vector<1x32xf32> to vector<16x32xf32>
      %45 = arith.addf %42, %44 : vector<16x32xf32>
      %46 = arith.truncf %45 : vector<16x32xf32> to vector<16x32xbf16>
      %c0_23 = arith.constant 0 : index
      %c0_24 = arith.constant 0 : index
      %47 = vector.load %arg8[%c0_23, %c0_24] : memref<16x32xbf16, #tpu.memory_space<vmem>>, vector<16x32xbf16>
      tpu.vector_store %arg8[%c0_23, %c0_24], %46 {strides = array<i32>} : memref<16x32xbf16, #tpu.memory_space<vmem>>, vector<16x32xbf16>,
    } else {
    }
    %c0 = arith.constant 0 : index
    %c0_1 = arith.constant 0 : index
    %3 = vector.load %arg8[%c0, %c0_1] : memref<16x32xbf16, #tpu.memory_space<vmem>>, vector<16x32xbf16>
    %c0_2 = arith.constant 0 : index
    %c0_3 = arith.constant 0 : index
    %4 = vector.load %arg5[%c0_2, %c0_3] : memref<32x128xbf16, #tpu.memory_space<vmem>>, vector<32x128xbf16>
    %cst = arith.constant dense<0.000000e+00> : vector<16x128xf32>
    %5 = tpu.matmul %3, %4, %cst {dimension_numbers = #tpu.dot_dimension_numbers<[1], [0], [0], [1], [0, 0, 1, 1], [], []>} : vector<16x32xbf16>, vector<32x128xbf16>, vector<16x128xf32> -> vector<16x128xf32>
    %c0_4 = arith.constant 0 : index
    %c0_5 = arith.constant 0 : index
    %6 = vector.load %arg6[%c0_4, %c0_5] : memref<1x128xf32, #tpu.memory_space<vmem>>, vector<1x128xf32>
    %7 = vector.broadcast %6 : vector<1x128xf32> to vector<16x128xf32>
    %8 = arith.addf %5, %7 : vector<16x128xf32>
    %cst_6 = arith.constant 5.000000e-01 : f32
    %9 = vector.broadcast %cst_6 : f32 to vector<16x128xf32>
    %10 = arith.mulf %9, %8 : vector<16x128xf32>
    %cst_7 = arith.constant 4.471500e-02 : f32
    %11 = vector.broadcast %cst_7 : f32 to vector<16x128xf32>
    %12 = arith.mulf %11, %8 : vector<16x128xf32>
    %13 = arith.mulf %12, %8 : vector<16x128xf32>
    %14 = arith.mulf %13, %8 : vector<16x128xf32>
    %15 = arith.addf %8, %14 : vector<16x128xf32>
    %cst_8 = arith.constant 0.797884583 : f32
    %16 = vector.broadcast %cst_8 : f32 to vector<16x128xf32>
    %17 = arith.mulf %16, %15 : vector<16x128xf32>
    %18 = math.tanh %17 : vector<16x128xf32>
    %cst_9 = arith.constant 1.000000e+00 : f32
    %19 = vector.broadcast %cst_9 : f32 to vector<16x128xf32>
    %20 = arith.addf %19, %18 : vector<16x128xf32>
    %21 = arith.mulf %10, %20 : vector<16x128xf32>
    %c0_10 = arith.constant 0 : index
    %c0_11 = arith.constant 0 : index
    %22 = vector.load %arg7[%c0_10, %c0_11] : memref<16x128xf32, #tpu.memory_space<vmem>>, vector<16x128xf32>
    tpu.vector_store %arg7[%c0_10, %c0_11], %21 {strides = array<i32>} : memref<16x128xf32, #tpu.memory_space<vmem>>, vector<16x128xf32>,
    return
  }
  func.func @transform_0(%arg0: i32, %arg1: i32) -> (i32, i32) {
    %c0_i32 = arith.constant 0 : i32
    %c0_i32_0 = arith.constant 0 : i32
    return %arg0, %c0_i32 : i32, i32
  }
  func.func @transform_1(%arg0: i32, %arg1: i32) -> (i32, i32) {
    %c0_i32 = arith.constant 0 : i32
    %c0_i32_0 = arith.constant 0 : i32
    %c0_i32_1 = arith.constant 0 : i32
    return %c0_i32, %c0_i32_0 : i32, i32
  }
  func.func @transform_2(%arg0: i32, %arg1: i32) -> (i32, i32) {
    %c0_i32 = arith.constant 0 : i32
    %c0_i32_0 = arith.constant 0 : i32
    %c0_i32_1 = arith.constant 0 : i32
    return %c0_i32, %c0_i32_0 : i32, i32
  }
  func.func @transform_3(%arg0: i32, %arg1: i32) -> (i32, i32) {
    %c0_i32 = arith.constant 0 : i32
    %c0_i32_0 = arith.constant 0 : i32
    return %c0_i32, %arg1 : i32, i32
  }
  func.func @transform_4(%arg0: i32, %arg1: i32) -> (i32, i32) {
    %c0_i32 = arith.constant 0 : i32
    %c0_i32_0 = arith.constant 0 : i32
    return %c0_i32, %arg1 : i32, i32
  }
  func.func @transform_5(%arg0: i32, %arg1: i32) -> (i32, i32) {
    %c0_i32 = arith.constant 0 : i32
    return %arg0, %arg1 : i32, i32
  }
}

module attributes {stable_mosaic.version = 11 : i64} {
  func.func @_attn_proj_res_kernel(%arg0: i32, %arg1: i32, %arg2: memref<1x8x96xf32, #tpu.memory_space<vmem>>, %arg3: memref<1x8x96xf32, #tpu.memory_space<vmem>>, %arg4: memref<32x32xbf16, #tpu.memory_space<vmem>>, %arg5: memref<1x32xf32, #tpu.memory_space<vmem>>, %arg6: memref<1x8x32xf32, #tpu.memory_space<vmem>>, %arg7: memref<1x8x32xf32, #tpu.memory_space<vmem>>) attributes {dimension_semantics = [#tpu.dimension_semantics<parallel>, #tpu.dimension_semantics<parallel>], iteration_bounds = array<i64: 2, 1>, scalar_prefetch = 0 : i64, scratch_operands = 0 : i64, tpu.core_type = #tpu.core_type<tc>, window_params = [{transform_indices = @transform_0, window_bounds = array<i64: 1, 8, 96>}, {transform_indices = @transform_1, window_bounds = array<i64: 1, 8, 96>}, {pipeline_mode = #tpu.pipeline_mode<synchronous>, transform_indices = @transform_2, window_bounds = array<i64: 32, 32>}, {pipeline_mode = #tpu.pipeline_mode<synchronous>, transform_indices = @transform_3, window_bounds = array<i64: 1, 32>}, {transform_indices = @transform_4, window_bounds = array<i64: 1, 8, 32>}, {transform_indices = @transform_5, window_bounds = array<i64: 1, 8, 32>}]} {
    %c8_i32 = arith.constant 8 : i32
    %0 = arith.muli %arg1, %c8_i32 : i32
    %c0 = arith.constant 0 : index
    %c0_0 = arith.constant 0 : index
    %c0_1 = arith.constant 0 : index
    %1 = vector.load %arg2[%c0, %c0_0, %c0_1] : memref<1x8x96xf32, #tpu.memory_space<vmem>>, vector<1x8x8xf32>
    %2 = vector.shape_cast %1 : vector<1x8x8xf32> to vector<8x8xf32>
    %c0_2 = arith.constant 0 : index
    %c0_3 = arith.constant 0 : index
    %c8 = arith.constant 8 : index
    %3 = vector.load %arg2[%c0_2, %c0_3, %c8] : memref<1x8x96xf32, #tpu.memory_space<vmem>>, vector<1x8x8xf32>
    %4 = vector.shape_cast %3 : vector<1x8x8xf32> to vector<8x8xf32>
    %c0_4 = arith.constant 0 : index
    %c0_5 = arith.constant 0 : index
    %c16 = arith.constant 16 : index
    %5 = vector.load %arg2[%c0_4, %c0_5, %c16] : memref<1x8x96xf32, #tpu.memory_space<vmem>>, vector<1x8x8xf32>
    %6 = vector.shape_cast %5 : vector<1x8x8xf32> to vector<8x8xf32>
    %c0_6 = arith.constant 0 : index
    %c0_7 = arith.constant 0 : index
    %c24 = arith.constant 24 : index
    %7 = vector.load %arg2[%c0_6, %c0_7, %c24] : memref<1x8x96xf32, #tpu.memory_space<vmem>>, vector<1x8x8xf32>
    %8 = vector.shape_cast %7 : vector<1x8x8xf32> to vector<8x8xf32>
    %9 = vector.shape_cast %2 : vector<8x8xf32> to vector<1x8x8xf32>
    %10 = vector.shape_cast %4 : vector<8x8xf32> to vector<1x8x8xf32>
    %11 = vector.shape_cast %6 : vector<8x8xf32> to vector<1x8x8xf32>
    %12 = vector.shape_cast %8 : vector<8x8xf32> to vector<1x8x8xf32>
    %13 = tpu.concatenate %9, %10, %11, %12 in 0 : vector<1x8x8xf32>, vector<1x8x8xf32>, vector<1x8x8xf32>, vector<1x8x8xf32> -> vector<4x8x8xf32>
    %14 = arith.truncf %13 : vector<4x8x8xf32> to vector<4x8x8xbf16>
    %cst = arith.constant 0xFF800000 : f32
    %15 = vector.broadcast %cst : f32 to vector<4x8x1xf32>
    %cst_8 = arith.constant 0.000000e+00 : f32
    %16 = vector.broadcast %cst_8 : f32 to vector<4x8x1xf32>
    %cst_9 = arith.constant 0.000000e+00 : f32
    %17 = vector.broadcast %cst_9 : f32 to vector<4x8x8xf32>
    %c0_10 = arith.constant 0 : index
    %c0_11 = arith.constant 0 : index
    %c32 = arith.constant 32 : index
    %18 = vector.load %arg3[%c0_10, %c0_11, %c32] : memref<1x8x96xf32, #tpu.memory_space<vmem>>, vector<1x8x8xf32>
    %19 = vector.shape_cast %18 : vector<1x8x8xf32> to vector<8x8xf32>
    %c0_12 = arith.constant 0 : index
    %c0_13 = arith.constant 0 : index
    %c40 = arith.constant 40 : index
    %20 = vector.load %arg3[%c0_12, %c0_13, %c40] : memref<1x8x96xf32, #tpu.memory_space<vmem>>, vector<1x8x8xf32>
    %21 = vector.shape_cast %20 : vector<1x8x8xf32> to vector<8x8xf32>
    %c0_14 = arith.constant 0 : index
    %c0_15 = arith.constant 0 : index
    %c48 = arith.constant 48 : index
    %22 = vector.load %arg3[%c0_14, %c0_15, %c48] : memref<1x8x96xf32, #tpu.memory_space<vmem>>, vector<1x8x8xf32>
    %23 = vector.shape_cast %22 : vector<1x8x8xf32> to vector<8x8xf32>
    %c0_16 = arith.constant 0 : index
    %c0_17 = arith.constant 0 : index
    %c56 = arith.constant 56 : index
    %24 = vector.load %arg3[%c0_16, %c0_17, %c56] : memref<1x8x96xf32, #tpu.memory_space<vmem>>, vector<1x8x8xf32>
    %25 = vector.shape_cast %24 : vector<1x8x8xf32> to vector<8x8xf32>
    %26 = vector.shape_cast %19 : vector<8x8xf32> to vector<1x8x8xf32>
    %27 = vector.shape_cast %21 : vector<8x8xf32> to vector<1x8x8xf32>
    %28 = vector.shape_cast %23 : vector<8x8xf32> to vector<1x8x8xf32>
    %29 = vector.shape_cast %25 : vector<8x8xf32> to vector<1x8x8xf32>
    %30 = tpu.concatenate %26, %27, %28, %29 in 0 : vector<1x8x8xf32>, vector<1x8x8xf32>, vector<1x8x8xf32>, vector<1x8x8xf32> -> vector<4x8x8xf32>
    %31 = arith.truncf %30 : vector<4x8x8xf32> to vector<4x8x8xbf16>
    %c0_18 = arith.constant 0 : index
    %c0_19 = arith.constant 0 : index
    %c64 = arith.constant 64 : index
    %32 = vector.load %arg3[%c0_18, %c0_19, %c64] : memref<1x8x96xf32, #tpu.memory_space<vmem>>, vector<1x8x8xf32>
    %33 = vector.shape_cast %32 : vector<1x8x8xf32> to vector<8x8xf32>
    %c0_20 = arith.constant 0 : index
    %c0_21 = arith.constant 0 : index
    %c72 = arith.constant 72 : index
    %34 = vector.load %arg3[%c0_20, %c0_21, %c72] : memref<1x8x96xf32, #tpu.memory_space<vmem>>, vector<1x8x8xf32>
    %35 = vector.shape_cast %34 : vector<1x8x8xf32> to vector<8x8xf32>
    %c0_22 = arith.constant 0 : index
    %c0_23 = arith.constant 0 : index
    %c80 = arith.constant 80 : index
    %36 = vector.load %arg3[%c0_22, %c0_23, %c80] : memref<1x8x96xf32, #tpu.memory_space<vmem>>, vector<1x8x8xf32>
    %37 = vector.shape_cast %36 : vector<1x8x8xf32> to vector<8x8xf32>
    %c0_24 = arith.constant 0 : index
    %c0_25 = arith.constant 0 : index
    %c88 = arith.constant 88 : index
    %38 = vector.load %arg3[%c0_24, %c0_25, %c88] : memref<1x8x96xf32, #tpu.memory_space<vmem>>, vector<1x8x8xf32>
    %39 = vector.shape_cast %38 : vector<1x8x8xf32> to vector<8x8xf32>
    %40 = vector.shape_cast %33 : vector<8x8xf32> to vector<1x8x8xf32>
    %41 = vector.shape_cast %35 : vector<8x8xf32> to vector<1x8x8xf32>
    %42 = vector.shape_cast %37 : vector<8x8xf32> to vector<1x8x8xf32>
    %43 = vector.shape_cast %39 : vector<8x8xf32> to vector<1x8x8xf32>
    %44 = tpu.concatenate %40, %41, %42, %43 in 0 : vector<1x8x8xf32>, vector<1x8x8xf32>, vector<1x8x8xf32>, vector<1x8x8xf32> -> vector<4x8x8xf32>
    %45 = arith.truncf %44 : vector<4x8x8xf32> to vector<4x8x8xbf16>
    "tpu.trace_start"() <{level = 10 : i32, message = "hqd,hkd->hqk"}> : () -> ()
    %cst_26 = arith.constant dense<0.000000e+00> : vector<4x8x8xf32>
    %46 = tpu.matmul %14, %31, %cst_26 {dimension_numbers = #tpu.dot_dimension_numbers<[2], [2], [1], [1], [0, 0, 0, 1, 1, 1], [0], [0]>} : vector<4x8x8xbf16>, vector<4x8x8xbf16>, vector<4x8x8xf32> -> vector<4x8x8xf32>
    "tpu.trace_stop"() : () -> ()
    %47 = tpu.iota {dimensions = array<i32: 0>} : vector<8x8xi32>
    %48 = vector.broadcast %0 : i32 to vector<8x8xi32>
    %49 = arith.addi %48, %47 : vector<8x8xi32>
    %50 = tpu.iota {dimensions = array<i32: 1>} : vector<8x8xi32>
    %c0_i32 = arith.constant 0 : i32
    %51 = vector.broadcast %c0_i32 : i32 to vector<8x8xi32>
    %52 = arith.addi %51, %50 : vector<8x8xi32>
    %53 = arith.cmpi sle, %52, %49 : vector<8x8xi32>
    %54 = vector.shape_cast %53 : vector<8x8xi1> to vector<1x8x8xi1>
    %cst_27 = arith.constant -1.000000e+04 : f32
    %55 = vector.shape_cast %54 : vector<1x8x8xi1> to vector<1x8x8xi1>
    %56 = vector.broadcast %55 : vector<1x8x8xi1> to vector<4x8x8xi1>
    %57 = vector.broadcast %cst_27 : f32 to vector<4x8x8xf32>
    %58 = arith.select %56, %46, %57 : vector<4x8x8xi1>, vector<4x8x8xf32>
    %cst_28 = arith.constant dense<0xFF800000> : vector<4x8xf32>
    %59 = vector.multi_reduction <maximumf>, %58, %cst_28 [2] : vector<4x8x8xf32> to vector<4x8xf32>
    %60 = vector.shape_cast %59 : vector<4x8xf32> to vector<4x8x1xf32>
    %61 = arith.maximumf %15, %60 : vector<4x8x1xf32>
    %62 = arith.subf %15, %61 : vector<4x8x1xf32>
    %63 = math.exp %62 : vector<4x8x1xf32>
    %64 = vector.broadcast %61 : vector<4x8x1xf32> to vector<4x8x8xf32>
    %65 = arith.subf %58, %64 : vector<4x8x8xf32>
    %66 = math.exp %65 : vector<4x8x8xf32>
    %67 = arith.mulf %63, %16 : vector<4x8x1xf32>
    %cst_29 = arith.constant dense<0.000000e+00> : vector<4x8xf32>
    %68 = vector.multi_reduction <add>, %66, %cst_29 [2] : vector<4x8x8xf32> to vector<4x8xf32>
    %69 = vector.shape_cast %68 : vector<4x8xf32> to vector<4x8x1xf32>
    %70 = arith.addf %67, %69 : vector<4x8x1xf32>
    %71 = arith.truncf %66 : vector<4x8x8xf32> to vector<4x8x8xbf16>
    "tpu.trace_start"() <{level = 10 : i32, message = "hqk,hkd->hqd"}> : () -> ()
    %cst_30 = arith.constant dense<0.000000e+00> : vector<4x8x8xf32>
    %72 = tpu.matmul %71, %45, %cst_30 {dimension_numbers = #tpu.dot_dimension_numbers<[2], [1], [1], [2], [0, 0, 0, 1, 1, 2], [0], [0]>} : vector<4x8x8xbf16>, vector<4x8x8xbf16>, vector<4x8x8xf32> -> vector<4x8x8xf32>
    "tpu.trace_stop"() : () -> ()
    %73 = vector.broadcast %63 : vector<4x8x1xf32> to vector<4x8x8xf32>
    %74 = arith.mulf %73, %17 : vector<4x8x8xf32>
    %75 = arith.addf %74, %72 : vector<4x8x8xf32>
    %76 = vector.broadcast %70 : vector<4x8x1xf32> to vector<4x8x8xf32>
    %77 = arith.divf %75, %76 : vector<4x8x8xf32>
    %78 = vector.extract_strided_slice %77 {offsets = [0, 0, 0], sizes = [1, 8, 8], strides = [1, 1, 1]} : vector<4x8x8xf32> to vector<1x8x8xf32>
    %79 = vector.shape_cast %78 : vector<1x8x8xf32> to vector<8x8xf32>
    %80 = vector.extract_strided_slice %77 {offsets = [1, 0, 0], sizes = [1, 8, 8], strides = [1, 1, 1]} : vector<4x8x8xf32> to vector<1x8x8xf32>
    %81 = vector.shape_cast %80 : vector<1x8x8xf32> to vector<8x8xf32>
    %82 = vector.extract_strided_slice %77 {offsets = [2, 0, 0], sizes = [1, 8, 8], strides = [1, 1, 1]} : vector<4x8x8xf32> to vector<1x8x8xf32>
    %83 = vector.shape_cast %82 : vector<1x8x8xf32> to vector<8x8xf32>
    %84 = vector.extract_strided_slice %77 {offsets = [3, 0, 0], sizes = [1, 8, 8], strides = [1, 1, 1]} : vector<4x8x8xf32> to vector<1x8x8xf32>
    %85 = vector.shape_cast %84 : vector<1x8x8xf32> to vector<8x8xf32>
    %86 = tpu.concatenate %79, %81, %83, %85 in 1 : vector<8x8xf32>, vector<8x8xf32>, vector<8x8xf32>, vector<8x8xf32> -> vector<8x32xf32>
    %87 = arith.truncf %86 : vector<8x32xf32> to vector<8x32xbf16>
    %c0_31 = arith.constant 0 : index
    %c0_32 = arith.constant 0 : index
    %88 = vector.load %arg4[%c0_31, %c0_32] : memref<32x32xbf16, #tpu.memory_space<vmem>>, vector<32x32xbf16>
    %cst_33 = arith.constant dense<0.000000e+00> : vector<8x32xf32>
    %89 = tpu.matmul %87, %88, %cst_33 {dimension_numbers = #tpu.dot_dimension_numbers<[1], [0], [0], [1], [0, 0, 1, 1], [], []>} : vector<8x32xbf16>, vector<32x32xbf16>, vector<8x32xf32> -> vector<8x32xf32>
    %c0_34 = arith.constant 0 : index
    %c0_35 = arith.constant 0 : index
    %90 = vector.load %arg5[%c0_34, %c0_35] : memref<1x32xf32, #tpu.memory_space<vmem>>, vector<1x32xf32>
    %91 = vector.broadcast %90 : vector<1x32xf32> to vector<8x32xf32>
    %92 = arith.addf %89, %91 : vector<8x32xf32>
    %c0_36 = arith.constant 0 : index
    %c0_37 = arith.constant 0 : index
    %c0_38 = arith.constant 0 : index
    %93 = vector.load %arg6[%c0_36, %c0_37, %c0_38] : memref<1x8x32xf32, #tpu.memory_space<vmem>>, vector<1x8x32xf32>
    %94 = vector.shape_cast %93 : vector<1x8x32xf32> to vector<8x32xf32>
    %95 = arith.addf %92, %94 : vector<8x32xf32>
    %c0_39 = arith.constant 0 : index
    %c0_40 = arith.constant 0 : index
    %c0_41 = arith.constant 0 : index
    %96 = vector.load %arg7[%c0_39, %c0_40, %c0_41] : memref<1x8x32xf32, #tpu.memory_space<vmem>>, vector<1x8x32xf32>
    %97 = vector.shape_cast %96 : vector<1x8x32xf32> to vector<8x32xf32>
    %98 = vector.shape_cast %95 : vector<8x32xf32> to vector<1x8x32xf32>
    tpu.vector_store %arg7[%c0_39, %c0_40, %c0_41], %98 {strides = array<i32>} : memref<1x8x32xf32, #tpu.memory_space<vmem>>, vector<1x8x32xf32>,
    return
  }
  func.func @transform_0(%arg0: i32, %arg1: i32) -> (i32, i32, i32) {
    %c0_i32 = arith.constant 0 : i32
    %c0_i32_0 = arith.constant 0 : i32
    return %arg0, %arg1, %c0_i32 : i32, i32, i32
  }
  func.func @transform_1(%arg0: i32, %arg1: i32) -> (i32, i32, i32) {
    %c0_i32 = arith.constant 0 : i32
    %c0_i32_0 = arith.constant 0 : i32
    %c0_i32_1 = arith.constant 0 : i32
    return %arg0, %c0_i32, %c0_i32_0 : i32, i32, i32
  }
  func.func @transform_2(%arg0: i32, %arg1: i32) -> (i32, i32) {
    %c0_i32 = arith.constant 0 : i32
    %c0_i32_0 = arith.constant 0 : i32
    %c0_i32_1 = arith.constant 0 : i32
    return %c0_i32, %c0_i32_0 : i32, i32
  }
  func.func @transform_3(%arg0: i32, %arg1: i32) -> (i32, i32) {
    %c0_i32 = arith.constant 0 : i32
    %c0_i32_0 = arith.constant 0 : i32
    %c0_i32_1 = arith.constant 0 : i32
    return %c0_i32, %c0_i32_0 : i32, i32
  }
  func.func @transform_4(%arg0: i32, %arg1: i32) -> (i32, i32, i32) {
    %c0_i32 = arith.constant 0 : i32
    %c0_i32_0 = arith.constant 0 : i32
    return %arg0, %arg1, %c0_i32 : i32, i32, i32
  }
  func.func @transform_5(%arg0: i32, %arg1: i32) -> (i32, i32, i32) {
    %c0_i32 = arith.constant 0 : i32
    %c0_i32_0 = arith.constant 0 : i32
    return %arg0, %arg1, %c0_i32 : i32, i32, i32
  }
}

module attributes {stable_mosaic.version = 11 : i64} {
  func.func @_linear_res_kernel(%arg0: i32, %arg1: i32, %arg2: memref<16x128xf32, #tpu.memory_space<vmem>>, %arg3: memref<128x32xbf16, #tpu.memory_space<vmem>>, %arg4: memref<1x32xf32, #tpu.memory_space<vmem>>, %arg5: memref<16x32xf32, #tpu.memory_space<vmem>>, %arg6: memref<16x32xf32, #tpu.memory_space<vmem>>) attributes {dimension_semantics = [#tpu.dimension_semantics<parallel>, #tpu.dimension_semantics<parallel>], iteration_bounds = array<i64: 1, 1>, scalar_prefetch = 0 : i64, scratch_operands = 0 : i64, tpu.core_type = #tpu.core_type<tc>, window_params = [{transform_indices = @transform_0, window_bounds = array<i64: 16, 128>}, {transform_indices = @transform_1, window_bounds = array<i64: 128, 32>}, {transform_indices = @transform_2, window_bounds = array<i64: 1, 32>}, {transform_indices = @transform_3, window_bounds = array<i64: 16, 32>}, {transform_indices = @transform_4, window_bounds = array<i64: 16, 32>}]} {
    %c0 = arith.constant 0 : index
    %c0_0 = arith.constant 0 : index
    %0 = vector.load %arg2[%c0, %c0_0] : memref<16x128xf32, #tpu.memory_space<vmem>>, vector<16x128xf32>
    %1 = arith.truncf %0 : vector<16x128xf32> to vector<16x128xbf16>
    %c0_1 = arith.constant 0 : index
    %c0_2 = arith.constant 0 : index
    %2 = vector.load %arg3[%c0_1, %c0_2] : memref<128x32xbf16, #tpu.memory_space<vmem>>, vector<128x32xbf16>
    %cst = arith.constant dense<0.000000e+00> : vector<16x32xf32>
    %3 = tpu.matmul %1, %2, %cst {dimension_numbers = #tpu.dot_dimension_numbers<[1], [0], [0], [1], [0, 0, 1, 1], [], []>} : vector<16x128xbf16>, vector<128x32xbf16>, vector<16x32xf32> -> vector<16x32xf32>
    %c0_3 = arith.constant 0 : index
    %c0_4 = arith.constant 0 : index
    %4 = vector.load %arg4[%c0_3, %c0_4] : memref<1x32xf32, #tpu.memory_space<vmem>>, vector<1x32xf32>
    %5 = vector.broadcast %4 : vector<1x32xf32> to vector<16x32xf32>
    %6 = arith.addf %3, %5 : vector<16x32xf32>
    %c0_5 = arith.constant 0 : index
    %c0_6 = arith.constant 0 : index
    %7 = vector.load %arg5[%c0_5, %c0_6] : memref<16x32xf32, #tpu.memory_space<vmem>>, vector<16x32xf32>
    %8 = arith.addf %6, %7 : vector<16x32xf32>
    %c0_7 = arith.constant 0 : index
    %c0_8 = arith.constant 0 : index
    %9 = vector.load %arg6[%c0_7, %c0_8] : memref<16x32xf32, #tpu.memory_space<vmem>>, vector<16x32xf32>
    tpu.vector_store %arg6[%c0_7, %c0_8], %8 {strides = array<i32>} : memref<16x32xf32, #tpu.memory_space<vmem>>, vector<16x32xf32>,
    return
  }
  func.func @transform_0(%arg0: i32, %arg1: i32) -> (i32, i32) {
    %c0_i32 = arith.constant 0 : i32
    %c0_i32_0 = arith.constant 0 : i32
    return %arg0, %c0_i32 : i32, i32
  }
  func.func @transform_1(%arg0: i32, %arg1: i32) -> (i32, i32) {
    %c0_i32 = arith.constant 0 : i32
    %c0_i32_0 = arith.constant 0 : i32
    return %c0_i32, %arg1 : i32, i32
  }
  func.func @transform_2(%arg0: i32, %arg1: i32) -> (i32, i32) {
    %c0_i32 = arith.constant 0 : i32
    %c0_i32_0 = arith.constant 0 : i32
    return %c0_i32, %arg1 : i32, i32
  }
  func.func @transform_3(%arg0: i32, %arg1: i32) -> (i32, i32) {
    %c0_i32 = arith.constant 0 : i32
    return %arg0, %arg1 : i32, i32
  }
  func.func @transform_4(%arg0: i32, %arg1: i32) -> (i32, i32) {
    %c0_i32 = arith.constant 0 : i32
    return %arg0, %arg1 : i32, i32
  }
}

</mosaic_0001>

<llo_original>
// kernel: block_forward.6
$region0: #{block_forward.6}
  #allocation0 [shape = 'u32[]', space=smem, size = 0x4, offset = 0x4, fixed_abs, tag = 'smem constant byte address 0x4 - core index']
  #allocation1 [shape = 'u32[72,128]{1,0:T(1,128)}', space=vmem, size = 0x9000, scoped, tag = 'internal scratch']
  #allocation2 [shape = 'bf16[16,32]{1,0:T(8,128)(2,1)}', space=vmem, size = 0x1000, scoped, tag = 'scratch operand']
  %s0 = inlined_call_operand.vmem [shape: f32[16,32], index: 0, kind: input, shape index: {}]
  %s1 = inlined_call_operand.vmem [shape: f32[1,32], index: 1, kind: input, shape index: {}]
  %s2 = inlined_call_operand.vmem [shape: f32[1,32], index: 2, kind: input, shape index: {}]
  %s3 = inlined_call_operand.vmem [shape: bf16[32,128], index: 3, kind: input, shape index: {}]
  %s4 = inlined_call_operand.vmem [shape: f32[1,128], index: 4, kind: input, shape index: {}]
  %s5 = inlined_call_operand.vmem [shape: f32[16,128], index: 5, kind: output, shape index: {}]
  %s6 = sld [smem:[#allocation0]]
  $region34: #{block_forward.6} parent=0
    _
  %s8 = ssub.s32 1, %s6
  %s9 = scalar_select 0, %s8, %s6
  // Predicated region
  $region2: #{block_forward.6} parent=0 // pred_check
    _
  $region3: #{block_forward.6} parent=0 // pred_check_branch
    %11 = sbr.rel (0) target = $region5
  $region4: #{block_forward.6} parent=0 // pred_region
    _
  $region5: #{block_forward.6} parent=0 // pred_fallthru
    _
  // Predicated region
  $region6: #{block_forward.6} parent=0 // pred_check
    _
  $region7: #{block_forward.6} parent=0 // pred_check_branch
    %13 = sbr.rel (0) target = $region9
  $region8: #{block_forward.6} parent=0 // pred_region
    _
  $region9: #{block_forward.6} parent=0 // pred_fallthru
    _
  // Predicated region
  $region10: #{block_forward.6} parent=0 // pred_check
    _
  $region11: #{block_forward.6} parent=0 // pred_check_branch
    %15 = sbr.rel (0) target = $region13
  $region12: #{block_forward.6} parent=0 // pred_region
    _
  $region13: #{block_forward.6} parent=0 // pred_fallthru
    _
  // Predicated region
  $region14: #{block_forward.6} parent=0 // pred_check
    _
  $region15: #{block_forward.6} parent=0 // pred_check_branch
    %17 = sbr.rel (0) target = $region17
  $region16: #{block_forward.6} parent=0 // pred_region
    _
  $region17: #{block_forward.6} parent=0 // pred_fallthru
    _
  // Predicated region
  $region18: #{block_forward.6} parent=0 // pred_check
    _
  $region19: #{block_forward.6} parent=0 // pred_check_branch
    %19 = sbr.rel (0) target = $region21
  $region20: #{block_forward.6} parent=0 // pred_region
    _
  $region21: #{block_forward.6} parent=0 // pred_fallthru
    _
  %p21 = scmp.eq.s32.totalorder 0, 0
  // Predicated region
  $region22: #{block_forward.6} parent=0 // pred_check
    %p22 = pneg %p21
  $region23: #{block_forward.6} parent=0 // pred_check_branch
    %24 = sbr.rel (%p22) target = $region25
  $region24: #{block_forward.6} parent=0 // pred_region
    %v25 = vld [vmem:[%s0] sm:$0xff]
    %v26 = vld [vmem:[%s0 + $0x8] sm:$0xff]
    %vm27 = vcmask 261120
    %v28 = vsel %vm27, %v25, 0.0
    %29 = vadd.xlane.f32.xlu0 %v28
    %v30 = vpop.xlane.xlu0 %29
    %v31 = vsel %vm27, %v26, 0.0
    %32 = vadd.xlane.f32.xlu0 %v31
    %v33 = vpop.xlane.xlu0 %32
    %v34 = vrcp.pop 32.0
    %v35 = vmul.f32 32.0, %v34
    %v36 = vsub.f32 1.0, %v35
    %v37 = vmul.f32 %v34, %v36
    %v38 = vadd.f32 %v34, %v37
    %vm39 = vweird.f32 %v34
    %v40 = vsel %vm39, %v34, %v38
    %v41 = vmul.f32 %v30, %v40
    %v42 = vmul.f32 %v33, %v40
    %v43 = vsub.f32 %v25, %v41
    %v44 = vsub.f32 %v26, %v42
    %v45 = vmul.f32 %v43, %v43
    %v46 = vmul.f32 %v44, %v44
    %v47 = vsel %vm27, %v45, 0.0
    %48 = vadd.xlane.f32.xlu0 %v47
    %v49 = vpop.xlane.xlu0 %48
    %v50 = vsel %vm27, %v46, 0.0
    %51 = vadd.xlane.f32.xlu0 %v50
    %v52 = vpop.xlane.xlu0 %51
    %v53 = vmul.f32 %v49, %v40
    %v54 = vmul.f32 %v52, %v40
    %v55 = vadd.f32 %v53, 1e-05
    %v56 = vadd.f32 %v54, 1e-05
    %v57 = vrsqrt.pop %v55
    %v58 = vmul.f32 %v57, %v55
    %v59 = vmul.f32 %v58, %v57
    %v60 = vmul.f32 0.5, %v59
    %v61 = vsub.f32 1.5, %v60
    %v62 = vmul.f32 %v57, %v61
    %vm63 = vweird.f32 %v55
    %vm64 = vweird.f32 %v57
    %vm65 = vmor %vm63, %vm64
    %v66 = vsel %vm65, %v57, %v62
    %v67 = vrsqrt.pop %v56
    %v68 = vmul.f32 %v67, %v56
    %v69 = vmul.f32 %v68, %v67
    %v70 = vmul.f32 0.5, %v69
    %v71 = vsub.f32 1.5, %v70
    %v72 = vmul.f32 %v67, %v71
    %vm73 = vweird.f32 %v56
    %vm74 = vweird.f32 %v67
    %vm75 = vmor %vm73, %vm74
    %v76 = vsel %vm75, %v67, %v72
    %v77 = vmul.f32 %v43, %v66
    %v78 = vmul.f32 %v44, %v76
    %v79 = vld [vmem:[%s1] sm:$0x1]
    %v81 = vperm.slane %v79, 0
    %v83 = vmul.f32 %v77, %v81
    %v84 = vmul.f32 %v78, %v81
    %v85 = vld [vmem:[%s2] sm:$0x1]
    %v87 = vperm.slane %v85, 0
    %v89 = vadd.f32 %v83, %v87
    %v90 = vadd.f32 %v84, %v87
    %v91 = vpack.c.bf16 %v89, %v89
    %v92 = vpack.c.bf16 %v90, %v90
    %vm93 = vcmask 257024
    %94 = vst.msk [vmem:[#allocation2] sm:$0xf] %vm93, %v91
    %95 = vst.msk [vmem:[#allocation2 + $0x4] sm:$0xf] %vm93, %v92
  $region25: #{block_forward.6} parent=0 // pred_fallthru
    _
  %v96 = vld [vmem:[#allocation2] sm:$0xf]
  %v97 = vld [vmem:[#allocation2 + $0x4] sm:$0xf]
  %v98 = vld [vmem:[%s3] sm:$0xf]
  %v99 = vld [vmem:[%s3 + $0x4] sm:$0xf]
  %v100 = vld [vmem:[%s3 + $0x8] sm:$0xf]
  %v101 = vld [vmem:[%s3 + $0xc] sm:$0xf]
  %v102 = vld [vmem:[%s4] sm:$0x1]
  %v104 = vperm.slane %v102, 0
  %v108 = vunpack.c.l.b16 %v96
  %v109 = vunpack.c.l.b16 %v97
  %v110 = vpack.c.b16 %v109, %v108
  %v115 = vunpack.c.l.b16 %v98
  %v116 = vunpack.c.l.b16 %v99
  %v117 = vunpack.c.l.b16 %v100
  %v118 = vunpack.c.l.b16 %v101
  %v119 = vpack.c.b16 %v116, %v115
  %v120 = vpack.c.b16 %v118, %v117
  %vm123 = vcmask 261120
  %v125 = vsel %vm123, %v110, 0
  %127 = vmatpush.bf16.msra.mxu0 0
  %128 = vmatpush.bf16.msra.mxu0 0
  %129 = vmatpush.bf16.msra.mxu0 0
  %130 = vmatpush.bf16.msra.mxu0 0
  %131 = vmatpush.bf16.msra.mxu0 0
  %132 = vmatpush.bf16.msra.mxu0 0
  %133 = vmatpush.bf16.msra.mxu0 %v120
  %134 = vmatpush.bf16.msra.mxu0 %v119
  %135 = vmatmul.bf16.gmra.mxu0 %v125
  %v136 = vpop.f32.mrf.mxu0
  %v137 = vadd.f32 %v104, %v136
  %v138 = vpop.f32.mrf.mxu0
  %v139 = vadd.f32 %v104, %v138
  %140 = vdwg.mxu0
  %v141 = vmul.f32 %v137, 0.5
  %v142 = vmul.f32 %v139, 0.5
  %v143 = vmul.f32 %v137, 0.044715
  %v144 = vmul.f32 %v139, 0.044715
  %v145 = vmul.f32 %v143, %v137
  %v146 = vmul.f32 %v144, %v139
  %v147 = vmul.f32 %v145, %v137
  %v148 = vmul.f32 %v146, %v139
  %v149 = vadd.f32 %v137, %v147
  %v150 = vadd.f32 %v139, %v148
  %v151 = vmul.f32 %v149, 0.7978846
  %v152 = vmul.f32 %v150, 0.7978846
  %v153 = vtanh.pop %v151
  %v154 = vtanh.pop %v152
  %v155 = vadd.f32 %v153, 1.0
  %v156 = vadd.f32 %v154, 1.0
  %v157 = vmul.f32 %v141, %v155
  %v158 = vmul.f32 %v142, %v156
  %159 = vst [vmem:[%s5] sm:$0xff] %v157
  %160 = vst [vmem:[%s5 + $0x8] sm:$0xff] %v158
  // Predicated region
  $region26: #{block_forward.6} parent=0 // pred_check
    _
  $region27: #{block_forward.6} parent=0 // pred_check_branch
    %162 = sbr.rel (0) target = $region29
  $region28: #{block_forward.6} parent=0 // pred_region
    _
  $region29: #{block_forward.6} parent=0 // pred_fallthru
    _
  // Predicated region
  $region30: #{block_forward.6} parent=0 // pred_check
    _
  $region31: #{block_forward.6} parent=0 // pred_check_branch
    %164 = sbr.rel (0) target = $region33
  $region32: #{block_forward.6} parent=0 // pred_region
    _
  $region33: #{block_forward.6} parent=0 // pred_fallthru
    _

// kernel: block_forward.4
$region0: #{block_forward.4}
  #allocation0 [shape = 'u32[]', space=smem, size = 0x4, offset = 0x4, fixed_abs, tag = 'smem constant byte address 0x4 - core index']
  #allocation1 [shape = 'u32[72,128]{1,0:T(1,128)}', space=vmem, size = 0x9000, scoped, tag = 'internal scratch']
  #allocation2 [shape = 'bf16[16,32]{1,0:T(8,128)(2,1)}', space=vmem, size = 0x1000, scoped, tag = 'scratch operand']
  %s0 = inlined_call_operand.vmem [shape: f32[16,32], index: 0, kind: input, shape index: {}]
  %s1 = inlined_call_operand.vmem [shape: f32[1,32], index: 1, kind: input, shape index: {}]
  %s2 = inlined_call_operand.vmem [shape: f32[1,32], index: 2, kind: input, shape index: {}]
  %s3 = inlined_call_operand.vmem [shape: bf16[32,96], index: 3, kind: input, shape index: {}]
  %s4 = inlined_call_operand.vmem [shape: f32[1,96], index: 4, kind: input, shape index: {}]
  %s5 = inlined_call_operand.vmem [shape: f32[16,96], index: 5, kind: output, shape index: {}]
  %s6 = sld [smem:[#allocation0]]
  $region34: #{block_forward.4} parent=0
    _
  %s8 = ssub.s32 1, %s6
  %s9 = scalar_select 0, %s8, %s6
  // Predicated region
  $region2: #{block_forward.4} parent=0 // pred_check
    _
  $region3: #{block_forward.4} parent=0 // pred_check_branch
    %11 = sbr.rel (0) target = $region5
  $region4: #{block_forward.4} parent=0 // pred_region
    _
  $region5: #{block_forward.4} parent=0 // pred_fallthru
    _
  // Predicated region
  $region6: #{block_forward.4} parent=0 // pred_check
    _
  $region7: #{block_forward.4} parent=0 // pred_check_branch
    %13 = sbr.rel (0) target = $region9
  $region8: #{block_forward.4} parent=0 // pred_region
    _
  $region9: #{block_forward.4} parent=0 // pred_fallthru
    _
  // Predicated region
  $region10: #{block_forward.4} parent=0 // pred_check
    _
  $region11: #{block_forward.4} parent=0 // pred_check_branch
    %15 = sbr.rel (0) target = $region13
  $region12: #{block_forward.4} parent=0 // pred_region
    _
  $region13: #{block_forward.4} parent=0 // pred_fallthru
    _
  // Predicated region
  $region14: #{block_forward.4} parent=0 // pred_check
    _
  $region15: #{block_forward.4} parent=0 // pred_check_branch
    %17 = sbr.rel (0) target = $region17
  $region16: #{block_forward.4} parent=0 // pred_region
    _
  $region17: #{block_forward.4} parent=0 // pred_fallthru
    _
  // Predicated region
  $region18: #{block_forward.4} parent=0 // pred_check
    _
  $region19: #{block_forward.4} parent=0 // pred_check_branch
    %19 = sbr.rel (0) target = $region21
  $region20: #{block_forward.4} parent=0 // pred_region
    _
  $region21: #{block_forward.4} parent=0 // pred_fallthru
    _
  %p21 = scmp.eq.s32.totalorder 0, 0
  // Predicated region
  $region22: #{block_forward.4} parent=0 // pred_check
    %p22 = pneg %p21
  $region23: #{block_forward.4} parent=0 // pred_check_branch
    %24 = sbr.rel (%p22) target = $region25
  $region24: #{block_forward.4} parent=0 // pred_region
    %v25 = vld [vmem:[%s0] sm:$0xff]
    %v26 = vld [vmem:[%s0 + $0x8] sm:$0xff]
    %vm27 = vcmask 261120
    %v28 = vsel %vm27, %v25, 0.0
    %29 = vadd.xlane.f32.xlu0 %v28
    %v30 = vpop.xlane.xlu0 %29
    %v31 = vsel %vm27, %v26, 0.0
    %32 = vadd.xlane.f32.xlu0 %v31
    %v33 = vpop.xlane.xlu0 %32
    %v34 = vrcp.pop 32.0
    %v35 = vmul.f32 32.0, %v34
    %v36 = vsub.f32 1.0, %v35
    %v37 = vmul.f32 %v34, %v36
    %v38 = vadd.f32 %v34, %v37
    %vm39 = vweird.f32 %v34
    %v40 = vsel %vm39, %v34, %v38
    %v41 = vmul.f32 %v30, %v40
    %v42 = vmul.f32 %v33, %v40
    %v43 = vsub.f32 %v25, %v41
    %v44 = vsub.f32 %v26, %v42
    %v45 = vmul.f32 %v43, %v43
    %v46 = vmul.f32 %v44, %v44
    %v47 = vsel %vm27, %v45, 0.0
    %48 = vadd.xlane.f32.xlu0 %v47
    %v49 = vpop.xlane.xlu0 %48
    %v50 = vsel %vm27, %v46, 0.0
    %51 = vadd.xlane.f32.xlu0 %v50
    %v52 = vpop.xlane.xlu0 %51
    %v53 = vmul.f32 %v49, %v40
    %v54 = vmul.f32 %v52, %v40
    %v55 = vadd.f32 %v53, 1e-05
    %v56 = vadd.f32 %v54, 1e-05
    %v57 = vrsqrt.pop %v55
    %v58 = vmul.f32 %v57, %v55
    %v59 = vmul.f32 %v58, %v57
    %v60 = vmul.f32 0.5, %v59
    %v61 = vsub.f32 1.5, %v60
    %v62 = vmul.f32 %v57, %v61
    %vm63 = vweird.f32 %v55
    %vm64 = vweird.f32 %v57
    %vm65 = vmor %vm63, %vm64
    %v66 = vsel %vm65, %v57, %v62
    %v67 = vrsqrt.pop %v56
    %v68 = vmul.f32 %v67, %v56
    %v69 = vmul.f32 %v68, %v67
    %v70 = vmul.f32 0.5, %v69
    %v71 = vsub.f32 1.5, %v70
    %v72 = vmul.f32 %v67, %v71
    %vm73 = vweird.f32 %v56
    %vm74 = vweird.f32 %v67
    %vm75 = vmor %vm73, %vm74
    %v76 = vsel %vm75, %v67, %v72
    %v77 = vmul.f32 %v43, %v66
    %v78 = vmul.f32 %v44, %v76
    %v79 = vld [vmem:[%s1] sm:$0x1]
    %v81 = vperm.slane %v79, 0
    %v83 = vmul.f32 %v77, %v81
    %v84 = vmul.f32 %v78, %v81
    %v85 = vld [vmem:[%s2] sm:$0x1]
    %v87 = vperm.slane %v85, 0
    %v89 = vadd.f32 %v83, %v87
    %v90 = vadd.f32 %v84, %v87
    %v91 = vpack.c.bf16 %v89, %v89
    %v92 = vpack.c.bf16 %v90, %v90
    %vm93 = vcmask 257024
    %94 = vst.msk [vmem:[#allocation2] sm:$0xf] %vm93, %v91
    %95 = vst.msk [vmem:[#allocation2 + $0x4] sm:$0xf] %vm93, %v92
  $region25: #{block_forward.4} parent=0 // pred_fallthru
    _
  %v96 = vld [vmem:[#allocation2] sm:$0xf]
  %v97 = vld [vmem:[#allocation2 + $0x4] sm:$0xf]
  %v98 = vld [vmem:[%s3] sm:$0xf]
  %v99 = vld [vmem:[%s3 + $0x4] sm:$0xf]
  %v100 = vld [vmem:[%s3 + $0x8] sm:$0xf]
  %v101 = vld [vmem:[%s3 + $0xc] sm:$0xf]
  %v102 = vld [vmem:[%s4] sm:$0x1]
  %v104 = vperm.slane %v102, 0
  %v108 = vunpack.c.l.b16 %v96
  %v109 = vunpack.c.l.b16 %v97
  %v110 = vpack.c.b16 %v109, %v108
  %v115 = vunpack.c.l.b16 %v98
  %v116 = vunpack.c.l.b16 %v99
  %v117 = vunpack.c.l.b16 %v100
  %v118 = vunpack.c.l.b16 %v101
  %v119 = vpack.c.b16 %v116, %v115
  %v120 = vpack.c.b16 %v118, %v117
  %vm123 = vcmask 261120
  %v125 = vsel %vm123, %v110, 0
  %127 = vmatpush.bf16.msra.mxu0 0
  %128 = vmatpush.bf16.msra.mxu0 0
  %129 = vmatpush.bf16.msra.mxu0 0
  %130 = vmatpush.bf16.msra.mxu0 0
  %131 = vmatpush.bf16.msra.mxu0 0
  %132 = vmatpush.bf16.msra.mxu0 0
  %133 = vmatpush.bf16.msra.mxu0 %v120
  %134 = vmatpush.bf16.msra.mxu0 %v119
  %135 = vmatmul.bf16.gmra.mxu0 %v125
  %v136 = vpop.f32.mrf.mxu0
  %v137 = vadd.f32 %v104, %v136
  %v138 = vpop.f32.mrf.mxu0
  %v139 = vadd.f32 %v104, %v138
  %140 = vdwg.mxu0
  %vm141 = vcmask 785408
  %142 = vst.msk [vmem:[%s5] sm:$0xff] %vm141, %v137
  %143 = vst.msk [vmem:[%s5 + $0x8] sm:$0xff] %vm141, %v139
  // Predicated region
  $region26: #{block_forward.4} parent=0 // pred_check
    _
  $region27: #{block_forward.4} parent=0 // pred_check_branch
    %145 = sbr.rel (0) target = $region29
  $region28: #{block_forward.4} parent=0 // pred_region
    _
  $region29: #{block_forward.4} parent=0 // pred_fallthru
    _
  // Predicated region
  $region30: #{block_forward.4} parent=0 // pred_check
    _
  $region31: #{block_forward.4} parent=0 // pred_check_branch
    %147 = sbr.rel (0) target = $region33
  $region32: #{block_forward.4} parent=0 // pred_region
    _
  $region33: #{block_forward.4} parent=0 // pred_fallthru
    _

// kernel: block_forward.7
$region0: #{block_forward.7}
  #allocation0 [shape = 'u32[]', space=smem, size = 0x4, offset = 0x4, fixed_abs, tag = 'smem constant byte address 0x4 - core index']
  #allocation1 [shape = 'u32[72,128]{1,0:T(1,128)}', space=vmem, size = 0x9000, scoped, tag = 'internal scratch']
  %s0 = inlined_call_operand.vmem [shape: f32[16,128], index: 0, kind: input, shape index: {}]
  %s1 = inlined_call_operand.vmem [shape: bf16[128,32], index: 1, kind: input, shape index: {}]
  %s2 = inlined_call_operand.vmem [shape: f32[1,32], index: 2, kind: input, shape index: {}]
  %s3 = inlined_call_operand.vmem [shape: f32[16,32], index: 3, kind: input, shape index: {}]
  %s4 = inlined_call_operand.hbm [shape: f32[16,32], index: 4, kind: output, shape index: {}]
  %s5 = sld [smem:[#allocation0]]
  $region26: #{block_forward.7} parent=0
    _
  %s7 = ssub.s32 1, %s5
  %s8 = scalar_select 0, %s7, %s5
  $region1: #{block_forward.7} parent=0
    #allocation2 [shape = 'u8[8192]{0}', space=vmem, size = 0x2000, scoped, tag = 'output window, operand 0, single buffered']
    #allocation3 [shape = 's32[1]{0}', space=sflag, size = 0x4, scoped, tag = 'scoped memory for block_forward.7']
    %9 = vsyncpa [#allocation3], 0
    // Predicated region
    $region2: #{block_forward.7} parent=1 // pred_check
      _
    $region3: #{block_forward.7} parent=1 // pred_check_branch
      %11 = sbr.rel (0) target = $region5
    $region4: #{block_forward.7} parent=1 // pred_region
      _
    $region5: #{block_forward.7} parent=1 // pred_fallthru
      _
    // Predicated region
    $region6: #{block_forward.7} parent=1 // pred_check
      _
    $region7: #{block_forward.7} parent=1 // pred_check_branch
      %13 = sbr.rel (0) target = $region9
    $region8: #{block_forward.7} parent=1 // pred_region
      _
    $region9: #{block_forward.7} parent=1 // pred_fallthru
      _
    // Predicated region
    $region10: #{block_forward.7} parent=1 // pred_check
      _
    $region11: #{block_forward.7} parent=1 // pred_check_branch
      %15 = sbr.rel (0) target = $region13
    $region12: #{block_forward.7} parent=1 // pred_region
      _
    $region13: #{block_forward.7} parent=1 // pred_fallthru
      _
    // Predicated region
    $region14: #{block_forward.7} parent=1 // pred_check
      _
    $region15: #{block_forward.7} parent=1 // pred_check_branch
      %17 = sbr.rel (0) target = $region17
    $region16: #{block_forward.7} parent=1 // pred_region
      _
    $region17: #{block_forward.7} parent=1 // pred_fallthru
      _
    %v18 = vld [vmem:[%s0] sm:$0xff]
    %v19 = vld [vmem:[%s0 + $0x8] sm:$0xff]
    %v20 = vpack.c.bf16 %v19, %v18
    %v21 = vld [vmem:[%s1] sm:$0xf]
    %v22 = vld [vmem:[%s1 + $0x4] sm:$0xf]
    %v23 = vld [vmem:[%s1 + $0x8] sm:$0xf]
    %v24 = vld [vmem:[%s1 + $0xc] sm:$0xf]
    %v25 = vld [vmem:[%s1 + $0x10] sm:$0xf]
    %v26 = vld [vmem:[%s1 + $0x14] sm:$0xf]
    %v27 = vld [vmem:[%s1 + $0x18] sm:$0xf]
    %v28 = vld [vmem:[%s1 + $0x1c] sm:$0xf]
    %v29 = vld [vmem:[%s1 + $0x20] sm:$0xf]
    %v30 = vld [vmem:[%s1 + $0x24] sm:$0xf]
    %v31 = vld [vmem:[%s1 + $0x28] sm:$0xf]
    %v32 = vld [vmem:[%s1 + $0x2c] sm:$0xf]
    %v33 = vld [vmem:[%s1 + $0x30] sm:$0xf]
    %v34 = vld [vmem:[%s1 + $0x34] sm:$0xf]
    %v35 = vld [vmem:[%s1 + $0x38] sm:$0xf]
    %v36 = vld [vmem:[%s1 + $0x3c] sm:$0xf]
    %v37 = vld [vmem:[%s2] sm:$0x1]
    %v39 = vperm.slane %v37, 0
    %v57 = vunpack.c.l.b16 %v21
    %v58 = vunpack.c.l.b16 %v22
    %v59 = vunpack.c.l.b16 %v23
    %v60 = vunpack.c.l.b16 %v24
    %v61 = vunpack.c.l.b16 %v25
    %v62 = vunpack.c.l.b16 %v26
    %v63 = vunpack.c.l.b16 %v27
    %v64 = vunpack.c.l.b16 %v28
    %v65 = vunpack.c.l.b16 %v29
    %v66 = vunpack.c.l.b16 %v30
    %v67 = vunpack.c.l.b16 %v31
    %v68 = vunpack.c.l.b16 %v32
    %v69 = vunpack.c.l.b16 %v33
    %v70 = vunpack.c.l.b16 %v34
    %v71 = vunpack.c.l.b16 %v35
    %v72 = vunpack.c.l.b16 %v36
    %v73 = vpack.c.b16 %v58, %v57
    %v74 = vpack.c.b16 %v60, %v59
    %v75 = vpack.c.b16 %v62, %v61
    %v76 = vpack.c.b16 %v64, %v63
    %v77 = vpack.c.b16 %v66, %v65
    %v78 = vpack.c.b16 %v68, %v67
    %v79 = vpack.c.b16 %v70, %v69
    %v80 = vpack.c.b16 %v72, %v71
    %89 = vmatpush.bf16.msra.mxu0 %v80
    %90 = vmatpush.bf16.msra.mxu0 %v79
    %91 = vmatpush.bf16.msra.mxu0 %v78
    %92 = vmatpush.bf16.msra.mxu0 %v77
    %93 = vmatpush.bf16.msra.mxu0 %v76
    %94 = vmatpush.bf16.msra.mxu0 %v75
    %95 = vmatpush.bf16.msra.mxu0 %v74
    %96 = vmatpush.bf16.msra.mxu0 %v73
    %97 = vmatmul.bf16.gmra.mxu0 %v20
    %v98 = vpop.f32.mrf.mxu0
    %v99 = vadd.f32 %v39, %v98
    %v100 = vpop.f32.mrf.mxu0
    %v101 = vadd.f32 %v39, %v100
    %102 = vdwg.mxu0
    %v103 = vld [vmem:[%s3] sm:$0xff]
    %v104 = vld [vmem:[%s3 + $0x8] sm:$0xff]
    %v105 = vadd.f32 %v99, %v103
    %v106 = vadd.f32 %v101, %v104
    %vm107 = vcmask 261120
    %108 = vst.msk [vmem:[#allocation2] sm:$0xff] %vm107, %v105
    %109 = vst.msk [vmem:[#allocation2 + $0x8] sm:$0xff] %vm107, %v106
    // Predicated region
    $region18: #{block_forward.7} parent=1 // pred_check
      _
    $region19: #{block_forward.7} parent=1 // pred_check_branch
      %111 = sbr.rel (0) target = $region21
    $region20: #{block_forward.7} parent=1 // pred_region
      %113 = vsyncadd [#allocation3], 0
      %s114 = sshll.u32 [#allocation2], 4
      %s115 = int_to_ptr.vmem [resolvable:$true] %s114
      %s116 = sshll.u32 %s4, 4
      %s117 = int_to_ptr.hbm [resolvable:$true] %s116
      %122 = dma.vmem_to_hbm [thread:$0]  %s115, 256, %s117, [#allocation3], 128, 128, 8
    $region21: #{block_forward.7} parent=1 // pred_fallthru
      _
    // Predicated region
    $region22: #{block_forward.7} parent=1 // pred_check
      _
    $region23: #{block_forward.7} parent=1 // pred_check_branch
      %124 = sbr.rel (0) target = $region25
    $region24: #{block_forward.7} parent=1 // pred_region
      %126 = dma.done [#allocation3], 256
    $region25: #{block_forward.7} parent=1 // pred_fallthru
      _
    %127 = vsyncpa [#allocation3], 1

// kernel: block_forward.5
$region0: #{block_forward.5}
  #allocation0 [shape = 'u32[]', space=smem, size = 0x4, offset = 0x4, fixed_abs, tag = 'smem constant byte address 0x4 - core index']
  #allocation1 [shape = 'u32[72,128]{1,0:T(1,128)}', space=vmem, size = 0x9000, scoped, tag = 'internal scratch']
  %s0 = inlined_call_operand.vmem [shape: f32[2,8,96], index: 0, kind: input, shape index: {}, may-alias: {0,1}]
  %s1 = inlined_call_operand.vmem [shape: f32[2,8,96], index: 1, kind: input, shape index: {}, may-alias: {0,1}]
  %s2 = inlined_call_operand.vmem [shape: bf16[32,32], index: 2, kind: input, shape index: {}]
  %s3 = inlined_call_operand.vmem [shape: f32[1,32], index: 3, kind: input, shape index: {}]
  %s4 = inlined_call_operand.vmem [shape: f32[2,8,32], index: 4, kind: input, shape index: {}]
  %s5 = inlined_call_operand.vmem [shape: f32[2,8,32], index: 5, kind: output, shape index: {}]
  %s6 = sld [smem:[#allocation0]]
  $region53: #{block_forward.5} parent=0
    _
  %s8 = ssub.s32 1, %s6
  %s9 = scalar_select 0, %s8, %s6
  loop: start=0, step=1, limit=4
  $region2: #{block_forward.5} parent=0 // loop_pre_header
    _
  $region3: #{block_forward.5} parent=0 // loop_header
    %s11 = sphi 0, %s15
    %p12 = scmp.ge.s32.totalorder %s11, 4
    %s18 = sphi 0, %s30
    %s19 = sphi 0, %s26
    %s20 = sphi 0, %s18
    %s21 = sphi 0, %s19
    %s22 = sphi 0, %s20
    %s23 = sphi 0, %s21
    %s35 = sphi 0, %s37
    %s38 = sphi 0, %s35
    %s39 = sphi 0, %s38
    %s55 = sphi 0, %s39
    %s61 = sphi 0, %s63
    %s64 = sphi 0, %s61
    %s65 = sphi 0, %s64
    %s81 = sphi 0, %s65
    %s85 = sphi 0, %s85
    %s87 = sphi 0, %s85
    %s88 = sphi 0, %s87
    %s102 = sphi 0, %s88
    %s106 = sphi 0, %s106
    %s108 = sphi 0, %s106
    %s109 = sphi 0, %s108
    %s123 = sphi 0, %s109
    %s131 = sphi 0, %s133
    %s134 = sphi 0, %s131
    %s135 = sphi 0, %s134
    %s151 = sphi 0, %s135
    %s159 = sphi 0, %s161
    %s162 = sphi 0, %s159
    %s163 = sphi 0, %s162
    %s179 = sphi 0, %s163
  $region4: #{block_forward.5} parent=0 // loop_header_branch
    %14 = sbr.rel (%p12) target = $region8
  $region5: #{block_forward.5} parent=0 // loop_body
    %s16 = ssub.s32 %s11, 1
    %s17 = ssub.s32 %s11, 2
    %s24 = sadd.s32 1, %s19
    %p25 = scmp.ge.s32.totalorder %s24, 1
    %s26 = scalar_select %p25, 0, %s24
    %s27 = sadd.s32 1, %s18
    %s28 = scalar_select %p25, %s27, %s18
    %p29 = scmp.ge.s32.totalorder %s28, 2
    %s30 = scalar_select %p29, 0, %s28
    %s31 = ssub.s32 %s18, %s30
    %s32 = ssub.s32 %s19, %s26
    %s33 = sor.u32 %s31, %s32
    %p34 = scmp.eq.s32.totalorder %s33, 0
    %s36 = sadd.s32 %s35, 1
    %s37 = scalar_select %p34, %s35, %s36
    %p40 = pneg %p34
    %p41 = scmp.eq.s32.totalorder %s11, 1
    %p42 = por %p40, %p41
    %p43 = scmp.ne.s32.totalorder %s35, %s38
    %p44 = scmp.eq.s32.totalorder %s11, 0
    %p45 = por %p43, %p44
    %p46 = scmp.ne.s32.totalorder %s35, %s38
    %p47 = scmp.eq.s32.totalorder %s16, 1
    %p48 = por %p46, %p47
    %p49 = scmp.ne.s32.totalorder %s38, %s39
    %p50 = scmp.eq.s32.totalorder %s16, 0
    %p51 = por %p49, %p50
    %p52 = scmp.ne.s32.totalorder %s38, %s39
    %p53 = scmp.eq.s32.totalorder %s17, 1
    %p54 = por %p52, %p53
    %p56 = scmp.ne.s32.totalorder %s39, %s55
    %p57 = scmp.eq.s32.totalorder %s17, 0
    %p58 = por %p56, %p57
    %s59 = ssub.s32 %s18, %s30
    %p60 = scmp.eq.s32.totalorder %s59, 0
    %s62 = sadd.s32 %s61, 1
    %s63 = scalar_select %p60, %s61, %s62
    %p66 = pneg %p60
    %p67 = scmp.eq.s32.totalorder %s11, 1
    %p68 = por %p66, %p67
    %p69 = scmp.ne.s32.totalorder %s61, %s64
    %p70 = scmp.eq.s32.totalorder %s11, 0
    %p71 = por %p69, %p70
    %p72 = scmp.ne.s32.totalorder %s61, %s64
    %p73 = scmp.eq.s32.totalorder %s16, 1
    %p74 = por %p72, %p73
    %p75 = scmp.ne.s32.totalorder %s64, %s65
    %p76 = scmp.eq.s32.totalorder %s16, 0
    %p77 = por %p75, %p76
    %p78 = scmp.ne.s32.totalorder %s64, %s65
    %p79 = scmp.eq.s32.totalorder %s17, 1
    %p80 = por %p78, %p79
    %p82 = scmp.ne.s32.totalorder %s65, %s81
    %p83 = scmp.eq.s32.totalorder %s17, 0
    %p84 = por %p82, %p83
    %s86 = sadd.s32 %s85, 1
    %p89 = scmp.eq.s32.totalorder %s11, 1
    %p90 = scmp.ne.s32.totalorder %s85, %s87
    %p91 = scmp.eq.s32.totalorder %s11, 0
    %p92 = por %p90, %p91
    %p93 = scmp.ne.s32.totalorder %s85, %s87
    %p94 = scmp.eq.s32.totalorder %s16, 1
    %p95 = por %p93, %p94
    %p96 = scmp.ne.s32.totalorder %s87, %s88
    %p97 = scmp.eq.s32.totalorder %s16, 0
    %p98 = por %p96, %p97
    %p99 = scmp.ne.s32.totalorder %s87, %s88
    %p100 = scmp.eq.s32.totalorder %s17, 1
    %p101 = por %p99, %p100
    %p103 = scmp.ne.s32.totalorder %s88, %s102
    %p104 = scmp.eq.s32.totalorder %s17, 0
    %p105 = por %p103, %p104
    %s107 = sadd.s32 %s106, 1
    %p110 = scmp.eq.s32.totalorder %s11, 1
    %p111 = scmp.ne.s32.totalorder %s106, %s108
    %p112 = scmp.eq.s32.totalorder %s11, 0
    %p113 = por %p111, %p112
    %p114 = scmp.ne.s32.totalorder %s106, %s108
    %p115 = scmp.eq.s32.totalorder %s16, 1
    %p116 = por %p114, %p115
    %p117 = scmp.ne.s32.totalorder %s108, %s109
    %p118 = scmp.eq.s32.totalorder %s16, 0
    %p119 = por %p117, %p118
    %p120 = scmp.ne.s32.totalorder %s108, %s109
    %p121 = scmp.eq.s32.totalorder %s17, 1
    %p122 = por %p120, %p121
    %p124 = scmp.ne.s32.totalorder %s109, %s123
    %p125 = scmp.eq.s32.totalorder %s17, 0
    %p126 = por %p124, %p125
    %s127 = ssub.s32 %s18, %s30
    %s128 = ssub.s32 %s19, %s26
    %s129 = sor.u32 %s127, %s128
    %p130 = scmp.eq.s32.totalorder %s129, 0
    %s132 = sadd.s32 %s131, 1
    %s133 = scalar_select %p130, %s131, %s132
    %p136 = pneg %p130
    %p137 = scmp.eq.s32.totalorder %s11, 1
    %p138 = por %p136, %p137
    %p139 = scmp.ne.s32.totalorder %s131, %s134
    %p140 = scmp.eq.s32.totalorder %s11, 0
    %p141 = por %p139, %p140
    %p142 = scmp.ne.s32.totalorder %s131, %s134
    %p143 = scmp.eq.s32.totalorder %s16, 1
    %p144 = por %p142, %p143
    %p145 = scmp.ne.s32.totalorder %s134, %s135
    %p146 = scmp.eq.s32.totalorder %s16, 0
    %p147 = por %p145, %p146
    %p148 = scmp.ne.s32.totalorder %s134, %s135
    %p149 = scmp.eq.s32.totalorder %s17, 1
    %p150 = por %p148, %p149
    %p152 = scmp.ne.s32.totalorder %s135, %s151
    %p153 = scmp.eq.s32.totalorder %s17, 0
    %p154 = por %p152, %p153
    %s155 = ssub.s32 %s18, %s30
    %s156 = ssub.s32 %s19, %s26
    %s157 = sor.u32 %s155, %s156
    %p158 = scmp.eq.s32.totalorder %s157, 0
    %s160 = sadd.s32 %s159, 1
    %s161 = scalar_select %p158, %s159, %s160
    %p164 = pneg %p158
    %p165 = scmp.eq.s32.totalorder %s11, 1
    %p166 = por %p164, %p165
    %p167 = scmp.ne.s32.totalorder %s159, %s162
    %p168 = scmp.eq.s32.totalorder %s11, 0
    %p169 = por %p167, %p168
    %p170 = scmp.ne.s32.totalorder %s159, %s162
    %p171 = scmp.eq.s32.totalorder %s16, 1
    %p172 = por %p170, %p171
    %p173 = scmp.ne.s32.totalorder %s162, %s163
    %p174 = scmp.eq.s32.totalorder %s16, 0
    %p175 = por %p173, %p174
    %p176 = scmp.ne.s32.totalorder %s162, %s163
    %p177 = scmp.eq.s32.totalorder %s17, 1
    %p178 = por %p176, %p177
    %p180 = scmp.ne.s32.totalorder %s163, %s179
    %p181 = scmp.eq.s32.totalorder %s17, 0
    %p182 = por %p180, %p181
    %p183 = scmp.le.s32.totalorder 1, %s11
    %p184 = scmp.lt.s32.totalorder %s11, 3
    %p185 = pnand %p183, %p184
    %p186 = pneg %p185
    // Predicated region
    $region9: #{block_forward.5} parent=5 // pred_check
      _
    $region10: #{block_forward.5} parent=5 // pred_check_branch
      %188 = sbr.rel (%p185) target = $region12
    $region11: #{block_forward.5} parent=5 // pred_region
      %s189 = ssub.s32 %s11, 1
      // Predicated region
      $region13: #{block_forward.5} parent=11 // pred_check
        %p190 = pneg %p98
      $region14: #{block_forward.5} parent=11 // pred_check_branch
        %192 = sbr.rel (%p190) target = $region16
      $region15: #{block_forward.5} parent=11 // pred_region
        _
      $region16: #{block_forward.5} parent=11 // pred_fallthru
        _
      // Predicated region
      $region17: #{block_forward.5} parent=11 // pred_check
        %p193 = pneg %p119
      $region18: #{block_forward.5} parent=11 // pred_check_branch
        %195 = sbr.rel (%p193) target = $region20
      $region19: #{block_forward.5} parent=11 // pred_region
        _
      $region20: #{block_forward.5} parent=11 // pred_fallthru
        _
    $region12: #{block_forward.5} parent=5 // pred_fallthru
      _
    %p196 = scmp.lt.s32.totalorder %s11, 2
    // Predicated region
    $region21: #{block_forward.5} parent=5 // pred_check
      %p197 = pneg %p196
    $region22: #{block_forward.5} parent=5 // pred_check_branch
      %199 = sbr.rel (%p197) target = $region24
    $region23: #{block_forward.5} parent=5 // pred_region
      // Predicated region
      $region25: #{block_forward.5} parent=23 // pred_check
        %p200 = pneg %p45
      $region26: #{block_forward.5} parent=23 // pred_check_branch
        %202 = sbr.rel (%p200) target = $region28
      $region27: #{block_forward.5} parent=23 // pred_region
        %p203 = scmp.lt.s32.totalorder %s18, 1
        %s204 = scalar_select %p203, %s18, 1
        %p205 = scmp.lt.s32.totalorder %s19, 0
        %s206 = scalar_select %p205, %s19, 0
        %s207 = sadd.s32 %s206, %s204
        %s208 = smul.addr %s207, 8
        %s209 = scalar_lea.vmem %s0, %s208
      $region28: #{block_forward.5} parent=23 // pred_fallthru
        _
      // Predicated region
      $region29: #{block_forward.5} parent=23 // pred_check
        %p210 = pneg %p71
      $region30: #{block_forward.5} parent=23 // pred_check_branch
        %212 = sbr.rel (%p210) target = $region32
      $region31: #{block_forward.5} parent=23 // pred_region
        %p213 = scmp.lt.s32.totalorder %s18, 1
        %s214 = scalar_select %p213, %s18, 1
        %s215 = smul.addr %s214, 8
        %s216 = scalar_lea.vmem %s1, %s215
      $region32: #{block_forward.5} parent=23 // pred_fallthru
        _
      // Predicated region
      $region33: #{block_forward.5} parent=23 // pred_check
        %p217 = pneg %p141
      $region34: #{block_forward.5} parent=23 // pred_check_branch
        %219 = sbr.rel (%p217) target = $region36
      $region35: #{block_forward.5} parent=23 // pred_region
        %p220 = scmp.lt.s32.totalorder %s18, 1
        %s221 = scalar_select %p220, %s18, 1
        %p222 = scmp.lt.s32.totalorder %s19, 0
        %s223 = scalar_select %p222, %s19, 0
        %s224 = sadd.s32 %s223, %s221
        %s225 = smul.addr %s224, 8
        %s226 = scalar_lea.vmem %s4, %s225
      $region36: #{block_forward.5} parent=23 // pred_fallthru
        _
    $region24: #{block_forward.5} parent=5 // pred_fallthru
      _
    %p227 = scmp.le.s32.totalorder 1, %s11
    %p228 = scmp.lt.s32.totalorder %s11, 3
    %p229 = pnand %p227, %p228
    %p230 = pneg %p229
    // Predicated region
    $region37: #{block_forward.5} parent=5 // pred_check
      _
    $region38: #{block_forward.5} parent=5 // pred_check_branch
      %232 = sbr.rel (%p229) target = $region40
    $region39: #{block_forward.5} parent=5 // pred_region
      %s233 = ssub.s32 %s11, 1
      %p234 = scmp.lt.s32.totalorder %s20, 1
      %s235 = scalar_select %p234, %s20, 1
      %p236 = scmp.lt.s32.totalorder %s21, 0
      %s237 = scalar_select %p236, %s21, 0
      %s238 = sadd.s32 %s237, %s235
      %s239 = smul.addr %s238, 8
      %s240 = scalar_lea.vmem %s0, %s239
      %p241 = pneg %p51
      %p242 = pneg %p48
      %p243 = scmp.lt.s32.totalorder %s20, 1
      %s244 = scalar_select %p243, %s20, 1
      %s245 = smul.addr %s244, 8
      %s246 = scalar_lea.vmem %s1, %s245
      %p247 = pneg %p77
      %p248 = pneg %p74
      %p249 = pneg %p98
      %p250 = pneg %p95
      %p251 = pneg %p119
      %p252 = pneg %p116
      %p253 = scmp.lt.s32.totalorder %s20, 1
      %s254 = scalar_select %p253, %s20, 1
      %p255 = scmp.lt.s32.totalorder %s21, 0
      %s256 = scalar_select %p255, %s21, 0
      %s257 = sadd.s32 %s256, %s254
      %s258 = smul.addr %s257, 8
      %s259 = scalar_lea.vmem %s4, %s258
      %p260 = pneg %p147
      %p261 = pneg %p144
      %p262 = pneg %p175
      %p263 = pneg %p172
      %p264 = scmp.lt.s32.totalorder %s20, 1
      %s265 = scalar_select %p264, %s20, 1
      %p266 = scmp.lt.s32.totalorder %s21, 0
      %s267 = scalar_select %p266, %s21, 0
      %s268 = sadd.s32 %s267, %s265
      %s269 = smul.addr %s268, 8
      %s270 = scalar_lea.vmem %s5, %s269
      %p271 = scmp.lt.s32.totalorder %s20, 1
      %s272 = scalar_select %p271, %s20, 1
      %p273 = scmp.lt.s32.totalorder %s21, 0
      %s274 = scalar_select %p273, %s21, 0
      %s275 = sadd.s32 %s274, %s272
      %s276 = smul.addr %s275, 8
      %s277 = scalar_lea.vmem %s0, %s276
      %p278 = scmp.lt.s32.totalorder %s20, 1
      %s279 = scalar_select %p278, %s20, 1
      %s280 = smul.addr %s279, 8
      %s281 = scalar_lea.vmem %s1, %s280
      %p282 = scmp.lt.s32.totalorder %s20, 1
      %s283 = scalar_select %p282, %s20, 1
      %p284 = scmp.lt.s32.totalorder %s21, 0
      %s285 = scalar_select %p284, %s21, 0
      %s286 = sadd.s32 %s285, %s283
      %s287 = smul.addr %s286, 8
      %s288 = scalar_lea.vmem %s4, %s287
      %p289 = scmp.lt.s32.totalorder %s20, 1
      %s290 = scalar_select %p289, %s20, 1
      %p291 = scmp.lt.s32.totalorder %s21, 0
      %s292 = scalar_select %p291, %s21, 0
      %s293 = sadd.s32 %s292, %s290
      %s294 = smul.addr %s293, 8
      %s295 = scalar_lea.vmem %s5, %s294
      %s297 = smul.u32 %s21, 8
      %v298 = vld [vmem:[%s277] sm:$0xff]
      %300 = vrot.lane.b32.xlu0 %v298, 120
      %v301 = vpop.permute.xlu0 %300
      %303 = vrot.lane.b32.xlu0 %v298, 112
      %v304 = vpop.permute.xlu0 %303
      %306 = vrot.lane.b32.xlu0 %v298, 104
      %v307 = vpop.permute.xlu0 %306
      %v309 = vpack.c.bf16 %v298, %v298
      %v310 = vpack.c.bf16 %v301, %v301
      %v311 = vpack.c.bf16 %v304, %v304
      %v312 = vpack.c.bf16 %v307, %v307
      %v313 = vld [vmem:[%s281] sm:$0xff]
      %315 = vrot.lane.b32.xlu0 %v313, 120
      %v316 = vpop.permute.xlu0 %315
      %318 = vrot.lane.b32.xlu0 %v313, 112
      %v319 = vpop.permute.xlu0 %318
      %321 = vrot.lane.b32.xlu0 %v313, 104
      %v322 = vpop.permute.xlu0 %321
      %v324 = vpack.c.bf16 %v313, %v313
      %v325 = vpack.c.bf16 %v316, %v316
      %v326 = vpack.c.bf16 %v319, %v319
      %v327 = vpack.c.bf16 %v322, %v322
      %v329 = vunpack.c.l.b16 %v324
      %v330 = vpack.c.b16 %v329, %v329
      %331 = vrot.lane.b32.xlu0 %v330, 96
      %v332 = vpop.permute.xlu0 %331
      %vm333 = vcmask 64512
      %v335 = vsel %vm333, %v309, 0
      %v338 = vsel %vm333, %v332, 0
      %340 = vmatpush.bf16.xpose.msra.mxu0 0
      %341 = vmatpush.bf16.xpose.msra.mxu0 0
      %342 = vmatpush.bf16.xpose.msra.mxu0 0
      %343 = vmatpush.bf16.xpose.msra.mxu0 0
      %344 = vmatpush.bf16.xpose.msra.mxu0 0
      %345 = vmatpush.bf16.xpose.msra.mxu0 0
      %346 = vmatpush.bf16.xpose.msra.mxu0 0
      %347 = vmatpush.bf16.xpose.msra.mxu0 %v338
      %348 = vmatmul.bf16.gmra.mxu0 %v335
      %v349 = vpop.f32.mrf.mxu0
      %v350 = vadd.f32 0.0, %v349
      %v351 = vpop.f32.mrf.mxu0
      %352 = vdwg.mxu0
      %v354 = vunpack.c.l.b16 %v325
      %v355 = vpack.c.b16 %v354, %v354
      %356 = vrot.lane.b32.xlu0 %v355, 96
      %v357 = vpop.permute.xlu0 %356
      %v359 = vsel %vm333, %v310, 0
      %v362 = vsel %vm333, %v357, 0
      %364 = vmatpush.bf16.xpose.msra.mxu0 0
      %365 = vmatpush.bf16.xpose.msra.mxu0 0
      %366 = vmatpush.bf16.xpose.msra.mxu0 0
      %367 = vmatpush.bf16.xpose.msra.mxu0 0
      %368 = vmatpush.bf16.xpose.msra.mxu0 0
      %369 = vmatpush.bf16.xpose.msra.mxu0 0
      %370 = vmatpush.bf16.xpose.msra.mxu0 0
      %371 = vmatpush.bf16.xpose.msra.mxu0 %v362
      %372 = vmatmul.bf16.gmra.mxu0 %v359
      %v373 = vpop.f32.mrf.mxu0
      %v374 = vadd.f32 0.0, %v373
      %v375 = vpop.f32.mrf.mxu0
      %376 = vdwg.mxu0
      %v378 = vunpack.c.l.b16 %v326
      %v379 = vpack.c.b16 %v378, %v378
      %380 = vrot.lane.b32.xlu0 %v379, 96
      %v381 = vpop.permute.xlu0 %380
      %v383 = vsel %vm333, %v311, 0
      %v386 = vsel %vm333, %v381, 0
      %388 = vmatpush.bf16.xpose.msra.mxu0 0
      %389 = vmatpush.bf16.xpose.msra.mxu0 0
      %390 = vmatpush.bf16.xpose.msra.mxu0 0
      %391 = vmatpush.bf16.xpose.msra.mxu0 0
      %392 = vmatpush.bf16.xpose.msra.mxu0 0
      %393 = vmatpush.bf16.xpose.msra.mxu0 0
      %394 = vmatpush.bf16.xpose.msra.mxu0 0
      %395 = vmatpush.bf16.xpose.msra.mxu0 %v386
      %396 = vmatmul.bf16.gmra.mxu0 %v383
      %v397 = vpop.f32.mrf.mxu0
      %v398 = vadd.f32 0.0, %v397
      %v399 = vpop.f32.mrf.mxu0
      %400 = vdwg.mxu0
      %v402 = vunpack.c.l.b16 %v327
      %v403 = vpack.c.b16 %v402, %v402
      %404 = vrot.lane.b32.xlu0 %v403, 96
      %v405 = vpop.permute.xlu0 %404
      %v407 = vsel %vm333, %v312, 0
      %v410 = vsel %vm333, %v405, 0
      %412 = vmatpush.bf16.xpose.msra.mxu0 0
      %413 = vmatpush.bf16.xpose.msra.mxu0 0
      %414 = vmatpush.bf16.xpose.msra.mxu0 0
      %415 = vmatpush.bf16.xpose.msra.mxu0 0
      %416 = vmatpush.bf16.xpose.msra.mxu0 0
      %417 = vmatpush.bf16.xpose.msra.mxu0 0
      %418 = vmatpush.bf16.xpose.msra.mxu0 0
      %419 = vmatpush.bf16.xpose.msra.mxu0 %v410
      %420 = vmatmul.bf16.gmra.mxu0 %v407
      %v421 = vpop.f32.mrf.mxu0
      %v422 = vadd.f32 0.0, %v421
      %v423 = vpop.f32.mrf.mxu0
      %424 = vdwg.mxu0
      %v425 = vlaneseq
      %v426 = vshrl.u32 %v425, 7
      %v427 = vstv %s297
      %v428 = vadd.s32 %v427, %v426
      %v429 = vlaneseq
      %v430 = vand.u32 %v429, 127
      %vm431 = vcmp.le.s32.totalorder %v430, %v428
      %v432 = vsel %vm431, 1, 0
      %vm433 = vcmp.eq.s32.totalorder %v432, 1
      %v434 = vsel %vm433, %v350, -10000.0
      %v435 = vsel %vm433, %v374, -10000.0
      %v436 = vsel %vm433, %v398, -10000.0
      %v437 = vsel %vm433, %v422, -10000.0
      %v438 = vsel %vm333, %v434, -inf
      %439 = vmax.xlane.f32.xlu0 %v438
      %v440 = vpop.xlane.xlu0 %439
      %v441 = vsel %vm333, %v435, -inf
      %442 = vmax.xlane.f32.xlu0 %v441
      %v443 = vpop.xlane.xlu0 %442
      %v444 = vsel %vm333, %v436, -inf
      %445 = vmax.xlane.f32.xlu0 %v444
      %v446 = vpop.xlane.xlu0 %445
      %v447 = vsel %vm333, %v437, -inf
      %448 = vmax.xlane.f32.xlu0 %v447
      %v449 = vpop.xlane.xlu0 %448
      %v450 = vsub.f32 -inf, %v440
      %v451 = vsub.f32 -inf, %v443
      %v452 = vsub.f32 -inf, %v446
      %v453 = vsub.f32 -inf, %v449
      %v454 = vmul.f32 %v450, 1.442695
      %v455 = vpow.pop %v454
      %v456 = vmul.f32 %v451, 1.442695
      %v457 = vpow.pop %v456
      %v458 = vmul.f32 %v452, 1.442695
      %v459 = vpow.pop %v458
      %v460 = vmul.f32 %v453, 1.442695
      %v461 = vpow.pop %v460
      %v462 = vsub.f32 %v434, %v440
      %v463 = vsub.f32 %v435, %v443
      %v464 = vsub.f32 %v436, %v446
      %v465 = vsub.f32 %v437, %v449
      %v466 = vmul.f32 %v462, 1.442695
      %v467 = vpow.pop %v466
      %v468 = vmul.f32 %v463, 1.442695
      %v469 = vpow.pop %v468
      %v470 = vmul.f32 %v464, 1.442695
      %v471 = vpow.pop %v470
      %v472 = vmul.f32 %v465, 1.442695
      %v473 = vpow.pop %v472
      %v474 = vmul.f32 %v455, 0.0
      %v475 = vmul.f32 %v457, 0.0
      %v476 = vmul.f32 %v459, 0.0
      %v477 = vmul.f32 %v461, 0.0
      %v478 = vsel %vm333, %v467, 0.0
      %479 = vadd.xlane.f32.xlu0 %v478
      %v480 = vpop.xlane.xlu0 %479
      %v481 = vsel %vm333, %v469, 0.0
      %482 = vadd.xlane.f32.xlu0 %v481
      %v483 = vpop.xlane.xlu0 %482
      %v484 = vsel %vm333, %v471, 0.0
      %485 = vadd.xlane.f32.xlu0 %v484
      %v486 = vpop.xlane.xlu0 %485
      %v487 = vsel %vm333, %v473, 0.0
      %488 = vadd.xlane.f32.xlu0 %v487
      %v489 = vpop.xlane.xlu0 %488
      %v490 = vadd.f32 %v474, %v480
      %v491 = vadd.f32 %v475, %v483
      %v492 = vadd.f32 %v476, %v486
      %v493 = vadd.f32 %v477, %v489
      %v494 = vpack.c.bf16 %v467, %v467
      %v495 = vpack.c.bf16 %v469, %v469
      %v496 = vpack.c.bf16 %v471, %v471
      %v497 = vpack.c.bf16 %v473, %v473
      %498 = vrot.lane.b32.xlu0 %v330, 64
      %v499 = vpop.permute.xlu0 %498
      %v501 = vsel %vm333, %v494, 0
      %vm503 = vcmask 1043456
      %v505 = vsel %vm503, %v499, 0
      %507 = vmatpush.bf16.msra.mxu0 0
      %508 = vmatpush.bf16.msra.mxu0 0
      %509 = vmatpush.bf16.msra.mxu0 0
      %510 = vmatpush.bf16.msra.mxu0 0
      %511 = vmatpush.bf16.msra.mxu0 0
      %512 = vmatpush.bf16.msra.mxu0 0
      %513 = vmatpush.bf16.msra.mxu0 0
      %514 = vmatpush.bf16.msra.mxu0 %v505
      %515 = vmatmul.bf16.gmra.mxu0 %v501
      %v516 = vpop.f32.mrf.mxu0
      %v517 = vadd.f32 0.0, %v516
      %v518 = vpop.f32.mrf.mxu0
      %519 = vdwg.mxu0
      %520 = vrot.lane.b32.xlu0 %v355, 64
      %v521 = vpop.permute.xlu0 %520
      %v523 = vsel %vm333, %v495, 0
      %v526 = vsel %vm503, %v521, 0
      %528 = vmatpush.bf16.msra.mxu0 0
      %529 = vmatpush.bf16.msra.mxu0 0
      %530 = vmatpush.bf16.msra.mxu0 0
      %531 = vmatpush.bf16.msra.mxu0 0
      %532 = vmatpush.bf16.msra.mxu0 0
      %533 = vmatpush.bf16.msra.mxu0 0
      %534 = vmatpush.bf16.msra.mxu0 0
      %535 = vmatpush.bf16.msra.mxu0 %v526
      %536 = vmatmul.bf16.gmra.mxu0 %v523
      %v537 = vpop.f32.mrf.mxu0
      %v538 = vadd.f32 0.0, %v537
      %v539 = vpop.f32.mrf.mxu0
      %540 = vdwg.mxu0
      %541 = vrot.lane.b32.xlu0 %v379, 64
      %v542 = vpop.permute.xlu0 %541
      %v544 = vsel %vm333, %v496, 0
      %v547 = vsel %vm503, %v542, 0
      %549 = vmatpush.bf16.msra.mxu0 0
      %550 = vmatpush.bf16.msra.mxu0 0
      %551 = vmatpush.bf16.msra.mxu0 0
      %552 = vmatpush.bf16.msra.mxu0 0
      %553 = vmatpush.bf16.msra.mxu0 0
      %554 = vmatpush.bf16.msra.mxu0 0
      %555 = vmatpush.bf16.msra.mxu0 0
      %556 = vmatpush.bf16.msra.mxu0 %v547
      %557 = vmatmul.bf16.gmra.mxu0 %v544
      %v558 = vpop.f32.mrf.mxu0
      %v559 = vadd.f32 0.0, %v558
      %v560 = vpop.f32.mrf.mxu0
      %561 = vdwg.mxu0
      %562 = vrot.lane.b32.xlu0 %v403, 64
      %v563 = vpop.permute.xlu0 %562
      %v565 = vsel %vm333, %v497, 0
      %v568 = vsel %vm503, %v563, 0
      %570 = vmatpush.bf16.msra.mxu0 0
      %571 = vmatpush.bf16.msra.mxu0 0
      %572 = vmatpush.bf16.msra.mxu0 0
      %573 = vmatpush.bf16.msra.mxu0 0
      %574 = vmatpush.bf16.msra.mxu0 0
      %575 = vmatpush.bf16.msra.mxu0 0
      %576 = vmatpush.bf16.msra.mxu0 0
      %577 = vmatpush.bf16.msra.mxu0 %v568
      %578 = vmatmul.bf16.gmra.mxu0 %v565
      %v579 = vpop.f32.mrf.mxu0
      %v580 = vadd.f32 0.0, %v579
      %v581 = vpop.f32.mrf.mxu0
      %582 = vdwg.mxu0
      %v583 = vadd.f32 %v474, %v517
      %v584 = vadd.f32 %v475, %v538
      %v585 = vadd.f32 %v476, %v559
      %v586 = vadd.f32 %v477, %v580
      %v587 = vrcp.pop %v490
      %v588 = vmul.f32 %v490, %v587
      %v589 = vsub.f32 1.0, %v588
      %v590 = vmul.f32 %v587, %v589
      %v591 = vadd.f32 %v587, %v590
      %vm592 = vweird.f32 %v490
      %vm593 = vweird.f32 %v587
      %vm594 = vmor %vm592, %vm593
      %v595 = vsel %vm594, %v587, %v591
      %v596 = vand.u32 2147483647, %v490
      %vm597 = vcmp.eq.f32.partialorder %v596, 8.507059e+37
      %v598 = vand.u32 %v490, 2147483648
      %v599 = vor.u32 1.1754944e-38, %v598
      %v600 = vsel %vm597, %v599, %v595
      %v601 = vmul.f32 %v583, %v600
      %v602 = vrcp.pop %v491
      %v603 = vmul.f32 %v491, %v602
      %v604 = vsub.f32 1.0, %v603
      %v605 = vmul.f32 %v602, %v604
      %v606 = vadd.f32 %v602, %v605
      %vm607 = vweird.f32 %v491
      %vm608 = vweird.f32 %v602
      %vm609 = vmor %vm607, %vm608
      %v610 = vsel %vm609, %v602, %v606
      %v611 = vand.u32 2147483647, %v491
      %vm612 = vcmp.eq.f32.partialorder %v611, 8.507059e+37
      %v613 = vand.u32 %v491, 2147483648
      %v614 = vor.u32 1.1754944e-38, %v613
      %v615 = vsel %vm612, %v614, %v610
      %v616 = vmul.f32 %v584, %v615
      %v617 = vrcp.pop %v492
      %v618 = vmul.f32 %v492, %v617
      %v619 = vsub.f32 1.0, %v618
      %v620 = vmul.f32 %v617, %v619
      %v621 = vadd.f32 %v617, %v620
      %vm622 = vweird.f32 %v492
      %vm623 = vweird.f32 %v617
      %vm624 = vmor %vm622, %vm623
      %v625 = vsel %vm624, %v617, %v621
      %v626 = vand.u32 2147483647, %v492
      %vm627 = vcmp.eq.f32.partialorder %v626, 8.507059e+37
      %v628 = vand.u32 %v492, 2147483648
      %v629 = vor.u32 1.1754944e-38, %v628
      %v630 = vsel %vm627, %v629, %v625
      %v631 = vmul.f32 %v585, %v630
      %v632 = vrcp.pop %v493
      %v633 = vmul.f32 %v493, %v632
      %v634 = vsub.f32 1.0, %v633
      %v635 = vmul.f32 %v632, %v634
      %v636 = vadd.f32 %v632, %v635
      %vm637 = vweird.f32 %v493
      %vm638 = vweird.f32 %v632
      %vm639 = vmor %vm637, %vm638
      %v640 = vsel %vm639, %v632, %v636
      %v641 = vand.u32 2147483647, %v493
      %vm642 = vcmp.eq.f32.partialorder %v641, 8.507059e+37
      %v643 = vand.u32 %v493, 2147483648
      %v644 = vor.u32 1.1754944e-38, %v643
      %v645 = vsel %vm642, %v644, %v640
      %v646 = vmul.f32 %v586, %v645
      %648 = vrot.lane.b32.xlu0 %v616, 8
      %v649 = vpop.permute.xlu0 %648
      %652 = vrot.lane.b32.xlu0 %v631, 16
      %v653 = vpop.permute.xlu0 %652
      %656 = vrot.lane.b32.xlu0 %v646, 24
      %v657 = vpop.permute.xlu0 %656
      %v659 = vsel %vm333, %v601, %v649
      %vm660 = vcmask 130048
      %v661 = vsel %vm660, %v659, %v653
      %vm662 = vcmask 195584
      %v663 = vsel %vm662, %v661, %v657
      %v664 = vpack.c.bf16 %v663, %v663
      %v665 = vld [vmem:[%s2] sm:$0xf]
      %v666 = vld [vmem:[%s2 + $0x4] sm:$0xf]
      %v667 = vld [vmem:[%s2 + $0x8] sm:$0xf]
      %v668 = vld [vmem:[%s2 + $0xc] sm:$0xf]
      %v669 = vld [vmem:[%s3] sm:$0x1]
      %v671 = vperm.slane %v669, 0
      %v677 = vunpack.c.l.b16 %v665
      %v678 = vunpack.c.l.b16 %v666
      %v679 = vunpack.c.l.b16 %v667
      %v680 = vunpack.c.l.b16 %v668
      %v681 = vpack.c.b16 %v678, %v677
      %v682 = vpack.c.b16 %v680, %v679
      %vm685 = vcmask 261120
      %v687 = vsel %vm685, %v664, 0
      %689 = vmatpush.bf16.msra.mxu0 0
      %690 = vmatpush.bf16.msra.mxu0 0
      %691 = vmatpush.bf16.msra.mxu0 0
      %692 = vmatpush.bf16.msra.mxu0 0
      %693 = vmatpush.bf16.msra.mxu0 0
      %694 = vmatpush.bf16.msra.mxu0 0
      %695 = vmatpush.bf16.msra.mxu0 %v682
      %696 = vmatpush.bf16.msra.mxu0 %v681
      %697 = vmatmul.bf16.gmra.mxu0 %v687
      %v698 = vpop.f32.mrf.mxu0
      %v699 = vadd.f32 %v671, %v698
      %v700 = vpop.f32.mrf.mxu0
      %701 = vdwg.mxu0
      %v702 = vld [vmem:[%s288] sm:$0xff]
      %v703 = vadd.f32 %v699, %v702
      %704 = vst.msk [vmem:[%s295] sm:$0xff] %vm685, %v703
      %p705 = scmp.lt.s32.totalorder %s20, 1
      %s706 = scalar_select %p705, %s20, 1
      %p707 = scmp.lt.s32.totalorder %s21, 0
      %s708 = scalar_select %p707, %s21, 0
      %s709 = sadd.s32 %s708, %s706
      %s710 = smul.addr %s709, 8
      %s711 = scalar_lea.vmem %s5, %s710
      // Predicated region
      $region41: #{block_forward.5} parent=39 // pred_check
        %p712 = pneg %p172
      $region42: #{block_forward.5} parent=39 // pred_check_branch
        %714 = sbr.rel (%p712) target = $region44
      $region43: #{block_forward.5} parent=39 // pred_region
        _
      $region44: #{block_forward.5} parent=39 // pred_fallthru
        _
    $region40: #{block_forward.5} parent=5 // pred_fallthru
      _
    %p715 = scmp.le.s32.totalorder 2, %s11
    // Predicated region
    $region45: #{block_forward.5} parent=5 // pred_check
      %p716 = pneg %p715
    $region46: #{block_forward.5} parent=5 // pred_check_branch
      %718 = sbr.rel (%p716) target = $region48
    $region47: #{block_forward.5} parent=5 // pred_region
      %s719 = ssub.s32 %s11, 2
      // Predicated region
      $region49: #{block_forward.5} parent=47 // pred_check
        %p720 = pneg %p178
      $region50: #{block_forward.5} parent=47 // pred_check_branch
        %722 = sbr.rel (%p720) target = $region52
      $region51: #{block_forward.5} parent=47 // pred_region
        %p723 = scmp.lt.s32.totalorder %s22, 1
        %s724 = scalar_select %p723, %s22, 1
        %p725 = scmp.lt.s32.totalorder %s23, 0
        %s726 = scalar_select %p725, %s23, 0
        %s727 = sadd.s32 %s726, %s724
        %s728 = smul.addr %s727, 8
        %s729 = scalar_lea.vmem %s5, %s728
      $region52: #{block_forward.5} parent=47 // pred_fallthru
        _
    $region48: #{block_forward.5} parent=5 // pred_fallthru
      _
  $region6: #{block_forward.5} parent=0 // loop_footer
    %s15 = sadd.s32 1, %s11
  $region7: #{block_forward.5} parent=0 // loop_footer_branch
    %10 = sbr.rel target = $region3
  $region8: #{block_forward.5} parent=0 // loop_exit
    _

</llo_original>
